<compile_context>
chip_gen: v6e
topology: v6e:2x2x1
jax: 0.10.0
libtpu: 0.0.40
codegen_flags: <defaults>
</compile_context>

<pallas_src>
import jax
import jax.numpy as jnp
from jax.experimental import pallas as pl
from jax.experimental.pallas import tpu as pltpu


# -----------------------------------------------------------------------------
# Fused kernel: full length-adapter conv chain + enc_to_dec_proj, one item per
# grid step.  All intermediates live in VMEM scratch; weights are resident.
# -----------------------------------------------------------------------------
def _make_fused_kernel(n_convs, t_in, t_out):
    def kernel(x_ref, w0_ref, w1_ref, bc_ref, wp_ref, bp_ref, o_ref,
               act_a, act_b):
        # Conv1d(C, C, kernel_size=2, stride=2) in channels-last is
        #   y[t] = x[2t] @ W0 + x[2t+1] @ W1 + b
        # with W0 = W[:, :, 0].T and W1 = W[:, :, 1].T (torch Conv1d weights).
        # Even/odd rows are read with sublane-strided slices, so no reshape or
        # cross-lane relayout is needed between stages.
        src = x_ref
        bufs = (act_a, act_b)
        m = t_in
        for s in range(n_convs):                      # static unroll
            half = m // 2
            even = src[pl.ds(0, half, stride=2), :].astype(jnp.bfloat16)
            odd = src[pl.ds(1, half, stride=2), :].astype(jnp.bfloat16)
            y = jnp.dot(even, w0_ref[s], preferred_element_type=jnp.float32)
            y = y + jnp.dot(odd, w1_ref[s], preferred_element_type=jnp.float32)
            y = y + bc_ref[s]                         # (1, C) f32 bias
            dst = bufs[s % 2]                         # ping-pong VMEM scratch
            dst[pl.ds(0, half), :] = y
            src = dst
            m = half

        # enc_to_dec_proj: Linear(C -> D), bf16 MXU inputs, f32 accumulate.
        h = src[pl.ds(0, t_out), :].astype(jnp.bfloat16)
        out = jnp.dot(h, wp_ref[...], preferred_element_type=jnp.float32)
        out = out + bp_ref[...]
        o_ref[...] = out.astype(o_ref.dtype)

    return kernel


def fused_adapter_proj(x, conv_params, proj_params):
    """Fused length_adapter (chain of stride-2/kernel-2 Conv1d) + enc_to_dec_proj.

    x:           (B_items, T, C) float32, channels-last item batch.
    conv_params: (w0, w1, b) with w0/w1 (n_convs, C, C), b (n_convs, 1, C).
    proj_params: (w, b) with w (C, D), b (D,).
    Returns (B_items, T >> n_convs, D) float32.
    """
    w0, w1, bc = conv_params
    pw, pb = proj_params
    B, T, C = x.shape
    n_convs = w0.shape[0]
    D = pw.shape[1]
    # TODO(synk): down_scale == 1 (nn.Identity adapter) path not wired here.
    assert n_convs >= 1, "Identity length adapter not supported in this kernel"
    assert T % (1 << n_convs) == 0, "sequence length must divide the down-scale"
    t_out = T >> n_convs

    # bf16 MXU inputs (f32 accumulation): 2x MXU throughput on v6e/v7x and
    # half the weight DMA bytes.  Biases stay in f32.
    w0 = w0.astype(jnp.bfloat16)
    w1 = w1.astype(jnp.bfloat16)
    pw = pw.astype(jnp.bfloat16)
    bc = bc.astype(jnp.float32)
    bp = pb.reshape(1, D).astype(jnp.float32)

    scratch_rows = max(T // 2, 8)
    kernel = _make_fused_kernel(n_convs, T, t_out)

    return pl.pallas_call(
        kernel,
        out_shape=jax.ShapeDtypeStruct((B, t_out, D), jnp.float32),
        grid=(B,),
        in_specs=[
            # per-item input block; leading item dim squeezed away in-kernel
            pl.BlockSpec((None, T, C), lambda b: (b, 0, 0)),
            # weights: constant block index => DMA'd once, resident across grid
            pl.BlockSpec((n_convs, C, C), lambda b: (0, 0, 0)),
            pl.BlockSpec((n_convs, C, C), lambda b: (0, 0, 0)),
            pl.BlockSpec((n_convs, 1, C), lambda b: (0, 0, 0)),
            pl.BlockSpec((C, D), lambda b: (0, 0)),
            pl.BlockSpec((1, D), lambda b: (0, 0)),
        ],
        out_specs=pl.BlockSpec((None, t_out, D), lambda b: (b, 0, 0)),
        scratch_shapes=[
            pltpu.VMEM((scratch_rows, C), jnp.float32),
            pltpu.VMEM((scratch_rows, C), jnp.float32),
        ],
        compiler_params=pltpu.CompilerParams(
            # "parallel" lets the two TensorCores on v7x split the item grid;
            # neutral on single-TC v5e/v6e.
            dimension_semantics=("parallel",)),
    )(x, w0, w1, bc, pw, bp)


# -----------------------------------------------------------------------------
# Data2QA forward (up to inputs_embeds, as fed to cal_loss in the torch module)
# -----------------------------------------------------------------------------
_MODALITY_KEYS = {
    "audio": ("conv_speech", "proj_speech"),
    "image": ("conv_cv", "proj_cv"),
    "text": ("conv_nlp", "proj_nlp"),
}

_FWD_CACHE = {}


def _build_forward(structure):
    """structure: tuple(tuple((type, shape), ...) per batch row) -- static."""
    flat = []
    for row in structure:
        for typ, shp in row:
            flat.append((typ, shp))

    # Group same-modality / same-shape items: one pallas_call (one weight DMA,
    # one item-grid) per group instead of one call per item.
    groups = {}
    for fi, (typ, shp) in enumerate(flat):
        groups.setdefault((typ, shp), []).append(fi)

    def fwd(params, *arrays):
        per_item = [None] * len(arrays)
        for (typ, _shp), idxs in groups.items():
            conv_key, proj_key = _MODALITY_KEYS[typ]
            xs = jnp.concatenate([arrays[fi] for fi in idxs], axis=0)  # (n,T,C)
            out = fused_adapter_proj(xs, params[conv_key], params[proj_key])
            for slot, fi in enumerate(idxs):
                per_item[fi] = out[slot]

        # per-batch concat + pad_sequence(batch_first=True, padding_value=-100)
        rows = []
        fi = 0
        for row in structure:
            pieces = []
            for _ in row:
                pieces.append(per_item[fi])
                fi += 1
            rows.append(jnp.concatenate(pieces, axis=0))
        max_len = max(r.shape[0] for r in rows)
        padded = [jnp.pad(r, ((0, max_len - r.shape[0]), (0, 0)),
                          constant_values=-100.0) for r in rows]
        return jnp.stack(padded, axis=0)

    return jax.jit(fwd)


def data2qa_forward(input_batch, params):
    """Returns inputs_embeds (B, max_len, D) with padding_value=-100 — exactly
    the tensor the torch module passes into cal_loss()."""
    arrays = []
    structure = []
    for batch in input_batch:
        row = []
        for item in batch:
            a = jnp.asarray(item["array"], dtype=jnp.float32)  # (1, T, C)
            arrays.append(a)
            row.append((item["type"], tuple(a.shape)))
        structure.append(tuple(row))
    structure = tuple(structure)
    if structure not in _FWD_CACHE:
        _FWD_CACHE[structure] = _build_forward(structure)
    return _FWD_CACHE[structure](params, *arrays)


# -----------------------------------------------------------------------------
# Parameter construction (deterministic, synthetic)
# -----------------------------------------------------------------------------
def make_conv_chain(key, hidden, n_convs, scale=0.05):
    """Split-weight Conv1d(C, C, k=2, s=2) chain:
    w0 = W[:, :, 0].T, w1 = W[:, :, 1].T in torch Conv1d terms."""
    k0, k1, kb = jax.random.split(key, 3)
    w0 = scale * jax.random.normal(k0, (n_convs, hidden, hidden), jnp.float32)
    w1 = scale * jax.random.normal(k1, (n_convs, hidden, hidden), jnp.float32)
    b = scale * jax.random.normal(kb, (n_convs, 1, hidden), jnp.float32)
    return (w0, w1, b)


def make_linear(key, c_in, c_out, scale=0.05):
    kw, kb = jax.random.split(key)
    w = scale * jax.random.normal(kw, (c_in, c_out), jnp.float32)
    b = scale * jax.random.normal(kb, (c_out,), jnp.float32)
    return (w, b)


# -----------------------------------------------------------------------------
# Pure-jnp references (same math; bf16=True mirrors the kernel's casts exactly)
# -----------------------------------------------------------------------------
def _ref_item(x, conv_params, proj_params, bf16):
    w0s, w1s, bs = conv_params
    pw, pb = proj_params
    cast = (lambda a: a.astype(jnp.bfloat16)) if bf16 else (lambda a: a)
    h = x
    for s in range(w0s.shape[0]):
        h = (jnp.dot(cast(h[0::2]), cast(w0s[s]),
                     preferred_element_type=jnp.float32)
             + jnp.dot(cast(h[1::2]), cast(w1s[s]),
                       preferred_element_type=jnp.float32)
             + bs[s])
    return (jnp.dot(cast(h), cast(pw), preferred_element_type=jnp.float32)
            + pb.reshape(1, -1))


def _ref_forward(input_batch, params, bf16=True):
    rows = []
    for batch in input_batch:
        pieces = []
        for item in batch:
            x = jnp.squeeze(jnp.asarray(item["array"], jnp.float32), axis=0)
            conv_key, proj_key = _MODALITY_KEYS[item["type"]]
            pieces.append(_ref_item(x, params[conv_key], params[proj_key], bf16))
        rows.append(jnp.concatenate(pieces, axis=0))
    max_len = max(r.shape[0] for r in rows)
    return jnp.stack(
        [jnp.pad(r, ((0, max_len - r.shape[0]), (0, 0)), constant_values=-100.0)
         for r in rows], axis=0)


if __name__ == "__main__":
    key = jax.random.PRNGKey(0)

    # Small synthetic config matching the module structure:
    #   down_scale_speech=8 (3 convs), down_scale_nlp=4 (2 convs),
    #   down_scale_cv=8 (3 convs); all hidden sizes 128.
    H_SPEECH, H_NLP, H_CV, D_DEC = 128, 128, 128, 128

    ks = jax.random.split(key, 10)
    params = {
        "conv_speech": make_conv_chain(ks[0], H_SPEECH, 3),
        "conv_nlp":    make_conv_chain(ks[1], H_NLP, 2),
        "conv_cv":     make_conv_chain(ks[2], H_CV, 3),
        "proj_speech": make_linear(ks[3], H_SPEECH, D_DEC),
        "proj_nlp":    make_linear(ks[4], H_NLP, D_DEC),
        "proj_cv":     make_linear(ks[5], H_CV, D_DEC),
    }

    # Synthetic encoder outputs (upstream HF encoders are not part of the
    # hot path implemented here).
    audio = jax.random.normal(ks[6], (1, 64, H_SPEECH), jnp.float32)
    image = jax.random.normal(ks[7], (1, 32, H_CV), jnp.float32)
    text0 = jax.random.normal(ks[8], (1, 16, H_NLP), jnp.float32)
    text1 = jax.random.normal(ks[9], (1, 16, H_NLP), jnp.float32)

    input_batch = [
        [{"array": audio, "type": "audio"}, {"array": text0, "type": "text"}],
        [{"array": image, "type": "image"}, {"array": text1, "type": "text"}],
    ]

    out = data2qa_forward(input_batch, params)
    out = jax.block_until_ready(out)
    assert out.shape == (2, 12, D_DEC), out.shape

    # Exact-math reference (same bf16 casts as the kernel): tight tolerance.
    ref_bf16 = _ref_forward(input_batch, params, bf16=True)
    assert jnp.allclose(out, ref_bf16, atol=2e-3, rtol=2e-3), \
        "mismatch vs bf16-matched reference"

    # Full-f32 reference (torch-module math): loose tolerance for bf16 inputs.
    ref_f32 = _ref_forward(input_batch, params, bf16=False)
    assert jnp.allclose(out, ref_f32, atol=7e-2, rtol=7e-2), \
        "mismatch vs f32 reference"

    print("KERNEL_OK")
</pallas_src>

<mosaic_0001>
module attributes {stable_mosaic.version = 11 : i64} {
  func.func @kernel(%arg0: i32, %arg1: memref<1x16x128xf32, #tpu.memory_space<vmem>>, %arg2: memref<2x128x128xbf16, #tpu.memory_space<vmem>>, %arg3: memref<2x128x128xbf16, #tpu.memory_space<vmem>>, %arg4: memref<2x1x128xf32, #tpu.memory_space<vmem>>, %arg5: memref<128x128xbf16, #tpu.memory_space<vmem>>, %arg6: memref<1x128xf32, #tpu.memory_space<vmem>>, %arg7: memref<1x4x128xf32, #tpu.memory_space<vmem>>, %arg8: memref<8x128xf32, #tpu.memory_space<vmem>>, %arg9: memref<8x128xf32, #tpu.memory_space<vmem>>) attributes {dimension_semantics = [#tpu.dimension_semantics<parallel>], iteration_bounds = array<i64: 2>, scalar_prefetch = 0 : i64, scratch_operands = 2 : i64, tpu.core_type = #tpu.core_type<tc>, window_params = [{transform_indices = @transform_0, window_bounds = array<i64: 1, 16, 128>}, {pipeline_mode = #tpu.pipeline_mode<synchronous>, transform_indices = @transform_1, window_bounds = array<i64: 2, 128, 128>}, {pipeline_mode = #tpu.pipeline_mode<synchronous>, transform_indices = @transform_2, window_bounds = array<i64: 2, 128, 128>}, {pipeline_mode = #tpu.pipeline_mode<synchronous>, transform_indices = @transform_3, window_bounds = array<i64: 2, 1, 128>}, {pipeline_mode = #tpu.pipeline_mode<synchronous>, transform_indices = @transform_4, window_bounds = array<i64: 128, 128>}, {pipeline_mode = #tpu.pipeline_mode<synchronous>, transform_indices = @transform_5, window_bounds = array<i64: 1, 128>}, {transform_indices = @transform_6, window_bounds = array<i64: 1, 4, 128>}]} {
    %c0 = arith.constant 0 : index
    %c0_0 = arith.constant 0 : index
    %c0_1 = arith.constant 0 : index
    %0 = tpu.strided_load %arg1[%c0, %c0_0, %c0_1] {strides = array<i32: 1, 2, 1>} : memref<1x16x128xf32, #tpu.memory_space<vmem>>, vector<1x8x128xf32>
    %1 = vector.shape_cast %0 : vector<1x8x128xf32> to vector<8x128xf32>
    %2 = arith.truncf %1 : vector<8x128xf32> to vector<8x128xbf16>
    %c0_2 = arith.constant 0 : index
    %c1 = arith.constant 1 : index
    %c0_3 = arith.constant 0 : index
    %3 = tpu.strided_load %arg1[%c0_2, %c1, %c0_3] {strides = array<i32: 1, 2, 1>} : memref<1x16x128xf32, #tpu.memory_space<vmem>>, vector<1x8x128xf32>
    %4 = vector.shape_cast %3 : vector<1x8x128xf32> to vector<8x128xf32>
    %5 = arith.truncf %4 : vector<8x128xf32> to vector<8x128xbf16>
    %c0_4 = arith.constant 0 : index
    %c0_5 = arith.constant 0 : index
    %c0_6 = arith.constant 0 : index
    %6 = vector.load %arg2[%c0_4, %c0_5, %c0_6] : memref<2x128x128xbf16, #tpu.memory_space<vmem>>, vector<1x128x128xbf16>
    %7 = vector.shape_cast %6 : vector<1x128x128xbf16> to vector<128x128xbf16>
    %cst = arith.constant dense<0.000000e+00> : vector<8x128xf32>
    %8 = tpu.matmul %2, %7, %cst {dimension_numbers = #tpu.dot_dimension_numbers<[1], [0], [0], [1], [0, 0, 1, 1], [], []>} : vector<8x128xbf16>, vector<128x128xbf16>, vector<8x128xf32> -> vector<8x128xf32>
    %c0_7 = arith.constant 0 : index
    %c0_8 = arith.constant 0 : index
    %c0_9 = arith.constant 0 : index
    %9 = vector.load %arg3[%c0_7, %c0_8, %c0_9] : memref<2x128x128xbf16, #tpu.memory_space<vmem>>, vector<1x128x128xbf16>
    %10 = vector.shape_cast %9 : vector<1x128x128xbf16> to vector<128x128xbf16>
    %cst_10 = arith.constant dense<0.000000e+00> : vector<8x128xf32>
    %11 = tpu.matmul %5, %10, %cst_10 {dimension_numbers = #tpu.dot_dimension_numbers<[1], [0], [0], [1], [0, 0, 1, 1], [], []>} : vector<8x128xbf16>, vector<128x128xbf16>, vector<8x128xf32> -> vector<8x128xf32>
    %12 = arith.addf %8, %11 : vector<8x128xf32>
    %c0_11 = arith.constant 0 : index
    %c0_12 = arith.constant 0 : index
    %c0_13 = arith.constant 0 : index
    %13 = vector.load %arg4[%c0_11, %c0_12, %c0_13] : memref<2x1x128xf32, #tpu.memory_space<vmem>>, vector<1x1x128xf32>
    %14 = vector.shape_cast %13 : vector<1x1x128xf32> to vector<1x128xf32>
    %15 = vector.broadcast %14 : vector<1x128xf32> to vector<8x128xf32>
    %16 = arith.addf %12, %15 : vector<8x128xf32>
    %c0_14 = arith.constant 0 : index
    %c0_15 = arith.constant 0 : index
    %17 = vector.load %arg8[%c0_14, %c0_15] : memref<8x128xf32, #tpu.memory_space<vmem>>, vector<8x128xf32>
    tpu.vector_store %arg8[%c0_14, %c0_15], %16 {strides = array<i32>} : memref<8x128xf32, #tpu.memory_space<vmem>>, vector<8x128xf32>,
    %c0_16 = arith.constant 0 : index
    %c0_17 = arith.constant 0 : index
    %18 = tpu.strided_load %arg8[%c0_16, %c0_17] {strides = array<i32: 2, 1>} : memref<8x128xf32, #tpu.memory_space<vmem>>, vector<4x128xf32>
    %19 = arith.truncf %18 : vector<4x128xf32> to vector<4x128xbf16>
    %c1_18 = arith.constant 1 : index
    %c0_19 = arith.constant 0 : index
    %20 = tpu.strided_load %arg8[%c1_18, %c0_19] {strides = array<i32: 2, 1>} : memref<8x128xf32, #tpu.memory_space<vmem>>, vector<4x128xf32>
    %21 = arith.truncf %20 : vector<4x128xf32> to vector<4x128xbf16>
    %c1_20 = arith.constant 1 : index
    %c0_21 = arith.constant 0 : index
    %c0_22 = arith.constant 0 : index
    %22 = vector.load %arg2[%c1_20, %c0_21, %c0_22] : memref<2x128x128xbf16, #tpu.memory_space<vmem>>, vector<1x128x128xbf16>
    %23 = vector.shape_cast %22 : vector<1x128x128xbf16> to vector<128x128xbf16>
    %cst_23 = arith.constant dense<0.000000e+00> : vector<4x128xf32>
    %24 = tpu.matmul %19, %23, %cst_23 {dimension_numbers = #tpu.dot_dimension_numbers<[1], [0], [0], [1], [0, 0, 1, 1], [], []>} : vector<4x128xbf16>, vector<128x128xbf16>, vector<4x128xf32> -> vector<4x128xf32>
    %c1_24 = arith.constant 1 : index
    %c0_25 = arith.constant 0 : index
    %c0_26 = arith.constant 0 : index
    %25 = vector.load %arg3[%c1_24, %c0_25, %c0_26] : memref<2x128x128xbf16, #tpu.memory_space<vmem>>, vector<1x128x128xbf16>
    %26 = vector.shape_cast %25 : vector<1x128x128xbf16> to vector<128x128xbf16>
    %cst_27 = arith.constant dense<0.000000e+00> : vector<4x128xf32>
    %27 = tpu.matmul %21, %26, %cst_27 {dimension_numbers = #tpu.dot_dimension_numbers<[1], [0], [0], [1], [0, 0, 1, 1], [], []>} : vector<4x128xbf16>, vector<128x128xbf16>, vector<4x128xf32> -> vector<4x128xf32>
    %28 = arith.addf %24, %27 : vector<4x128xf32>
    %c1_28 = arith.constant 1 : index
    %c0_29 = arith.constant 0 : index
    %c0_30 = arith.constant 0 : index
    %29 = vector.load %arg4[%c1_28, %c0_29, %c0_30] : memref<2x1x128xf32, #tpu.memory_space<vmem>>, vector<1x1x128xf32>
    %30 = vector.shape_cast %29 : vector<1x1x128xf32> to vector<1x128xf32>
    %31 = vector.broadcast %30 : vector<1x128xf32> to vector<4x128xf32>
    %32 = arith.addf %28, %31 : vector<4x128xf32>
    %c0_31 = arith.constant 0 : index
    %c0_32 = arith.constant 0 : index
    %33 = vector.load %arg9[%c0_31, %c0_32] : memref<8x128xf32, #tpu.memory_space<vmem>>, vector<4x128xf32>
    tpu.vector_store %arg9[%c0_31, %c0_32], %32 {strides = array<i32>} : memref<8x128xf32, #tpu.memory_space<vmem>>, vector<4x128xf32>,
    %c0_33 = arith.constant 0 : index
    %c0_34 = arith.constant 0 : index
    %34 = vector.load %arg9[%c0_33, %c0_34] : memref<8x128xf32, #tpu.memory_space<vmem>>, vector<4x128xf32>
    %35 = arith.truncf %34 : vector<4x128xf32> to vector<4x128xbf16>
    %c0_35 = arith.constant 0 : index
    %c0_36 = arith.constant 0 : index
    %36 = vector.load %arg5[%c0_35, %c0_36] : memref<128x128xbf16, #tpu.memory_space<vmem>>, vector<128x128xbf16>
    %cst_37 = arith.constant dense<0.000000e+00> : vector<4x128xf32>
    %37 = tpu.matmul %35, %36, %cst_37 {dimension_numbers = #tpu.dot_dimension_numbers<[1], [0], [0], [1], [0, 0, 1, 1], [], []>} : vector<4x128xbf16>, vector<128x128xbf16>, vector<4x128xf32> -> vector<4x128xf32>
    %c0_38 = arith.constant 0 : index
    %c0_39 = arith.constant 0 : index
    %38 = vector.load %arg6[%c0_38, %c0_39] : memref<1x128xf32, #tpu.memory_space<vmem>>, vector<1x128xf32>
    %39 = vector.broadcast %38 : vector<1x128xf32> to vector<4x128xf32>
    %40 = arith.addf %37, %39 : vector<4x128xf32>
    %c0_40 = arith.constant 0 : index
    %c0_41 = arith.constant 0 : index
    %c0_42 = arith.constant 0 : index
    %41 = vector.load %arg7[%c0_40, %c0_41, %c0_42] : memref<1x4x128xf32, #tpu.memory_space<vmem>>, vector<1x4x128xf32>
    %42 = vector.shape_cast %41 : vector<1x4x128xf32> to vector<4x128xf32>
    %43 = vector.shape_cast %40 : vector<4x128xf32> to vector<1x4x128xf32>
    tpu.vector_store %arg7[%c0_40, %c0_41, %c0_42], %43 {strides = array<i32>} : memref<1x4x128xf32, #tpu.memory_space<vmem>>, vector<1x4x128xf32>,
    return
  }
  func.func @transform_0(%arg0: i32) -> (i32, i32, i32) {
    %c0_i32 = arith.constant 0 : i32
    %c0_i32_0 = arith.constant 0 : i32
    %c0_i32_1 = arith.constant 0 : i32
    return %arg0, %c0_i32, %c0_i32_0 : i32, i32, i32
  }
  func.func @transform_1(%arg0: i32) -> (i32, i32, i32) {
    %c0_i32 = arith.constant 0 : i32
    %c0_i32_0 = arith.constant 0 : i32
    %c0_i32_1 = arith.constant 0 : i32
    %c0_i32_2 = arith.constant 0 : i32
    return %c0_i32, %c0_i32_0, %c0_i32_1 : i32, i32, i32
  }
  func.func @transform_2(%arg0: i32) -> (i32, i32, i32) {
    %c0_i32 = arith.constant 0 : i32
    %c0_i32_0 = arith.constant 0 : i32
    %c0_i32_1 = arith.constant 0 : i32
    %c0_i32_2 = arith.constant 0 : i32
    return %c0_i32, %c0_i32_0, %c0_i32_1 : i32, i32, i32
  }
  func.func @transform_3(%arg0: i32) -> (i32, i32, i32) {
    %c0_i32 = arith.constant 0 : i32
    %c0_i32_0 = arith.constant 0 : i32
    %c0_i32_1 = arith.constant 0 : i32
    %c0_i32_2 = arith.constant 0 : i32
    return %c0_i32, %c0_i32_0, %c0_i32_1 : i32, i32, i32
  }
  func.func @transform_4(%arg0: i32) -> (i32, i32) {
    %c0_i32 = arith.constant 0 : i32
    %c0_i32_0 = arith.constant 0 : i32
    %c0_i32_1 = arith.constant 0 : i32
    return %c0_i32, %c0_i32_0 : i32, i32
  }
  func.func @transform_5(%arg0: i32) -> (i32, i32) {
    %c0_i32 = arith.constant 0 : i32
    %c0_i32_0 = arith.constant 0 : i32
    %c0_i32_1 = arith.constant 0 : i32
    return %c0_i32, %c0_i32_0 : i32, i32
  }
  func.func @transform_6(%arg0: i32) -> (i32, i32, i32) {
    %c0_i32 = arith.constant 0 : i32
    %c0_i32_0 = arith.constant 0 : i32
    %c0_i32_1 = arith.constant 0 : i32
    return %arg0, %c0_i32, %c0_i32_0 : i32, i32, i32
  }
}

module attributes {stable_mosaic.version = 11 : i64} {
  func.func @kernel(%arg0: i32, %arg1: memref<1x64x128xf32, #tpu.memory_space<vmem>>, %arg2: memref<3x128x128xbf16, #tpu.memory_space<vmem>>, %arg3: memref<3x128x128xbf16, #tpu.memory_space<vmem>>, %arg4: memref<3x1x128xf32, #tpu.memory_space<vmem>>, %arg5: memref<128x128xbf16, #tpu.memory_space<vmem>>, %arg6: memref<1x128xf32, #tpu.memory_space<vmem>>, %arg7: memref<1x8x128xf32, #tpu.memory_space<vmem>>, %arg8: memref<32x128xf32, #tpu.memory_space<vmem>>, %arg9: memref<32x128xf32, #tpu.memory_space<vmem>>) attributes {dimension_semantics = [#tpu.dimension_semantics<parallel>], iteration_bounds = array<i64: 1>, scalar_prefetch = 0 : i64, scratch_operands = 2 : i64, tpu.core_type = #tpu.core_type<tc>, window_params = [{transform_indices = @transform_0, window_bounds = array<i64: 1, 64, 128>}, {pipeline_mode = #tpu.pipeline_mode<synchronous>, transform_indices = @transform_1, window_bounds = array<i64: 3, 128, 128>}, {pipeline_mode = #tpu.pipeline_mode<synchronous>, transform_indices = @transform_2, window_bounds = array<i64: 3, 128, 128>}, {pipeline_mode = #tpu.pipeline_mode<synchronous>, transform_indices = @transform_3, window_bounds = array<i64: 3, 1, 128>}, {pipeline_mode = #tpu.pipeline_mode<synchronous>, transform_indices = @transform_4, window_bounds = array<i64: 128, 128>}, {pipeline_mode = #tpu.pipeline_mode<synchronous>, transform_indices = @transform_5, window_bounds = array<i64: 1, 128>}, {transform_indices = @transform_6, window_bounds = array<i64: 1, 8, 128>}]} {
    %c0 = arith.constant 0 : index
    %c0_0 = arith.constant 0 : index
    %c0_1 = arith.constant 0 : index
    %0 = tpu.strided_load %arg1[%c0, %c0_0, %c0_1] {strides = array<i32: 1, 2, 1>} : memref<1x64x128xf32, #tpu.memory_space<vmem>>, vector<1x32x128xf32>
    %1 = vector.shape_cast %0 : vector<1x32x128xf32> to vector<32x128xf32>
    %2 = arith.truncf %1 : vector<32x128xf32> to vector<32x128xbf16>
    %c0_2 = arith.constant 0 : index
    %c1 = arith.constant 1 : index
    %c0_3 = arith.constant 0 : index
    %3 = tpu.strided_load %arg1[%c0_2, %c1, %c0_3] {strides = array<i32: 1, 2, 1>} : memref<1x64x128xf32, #tpu.memory_space<vmem>>, vector<1x32x128xf32>
    %4 = vector.shape_cast %3 : vector<1x32x128xf32> to vector<32x128xf32>
    %5 = arith.truncf %4 : vector<32x128xf32> to vector<32x128xbf16>
    %c0_4 = arith.constant 0 : index
    %c0_5 = arith.constant 0 : index
    %c0_6 = arith.constant 0 : index
    %6 = vector.load %arg2[%c0_4, %c0_5, %c0_6] : memref<3x128x128xbf16, #tpu.memory_space<vmem>>, vector<1x128x128xbf16>
    %7 = vector.shape_cast %6 : vector<1x128x128xbf16> to vector<128x128xbf16>
    %cst = arith.constant dense<0.000000e+00> : vector<32x128xf32>
    %8 = tpu.matmul %2, %7, %cst {dimension_numbers = #tpu.dot_dimension_numbers<[1], [0], [0], [1], [0, 0, 1, 1], [], []>} : vector<32x128xbf16>, vector<128x128xbf16>, vector<32x128xf32> -> vector<32x128xf32>
    %c0_7 = arith.constant 0 : index
    %c0_8 = arith.constant 0 : index
    %c0_9 = arith.constant 0 : index
    %9 = vector.load %arg3[%c0_7, %c0_8, %c0_9] : memref<3x128x128xbf16, #tpu.memory_space<vmem>>, vector<1x128x128xbf16>
    %10 = vector.shape_cast %9 : vector<1x128x128xbf16> to vector<128x128xbf16>
    %cst_10 = arith.constant dense<0.000000e+00> : vector<32x128xf32>
    %11 = tpu.matmul %5, %10, %cst_10 {dimension_numbers = #tpu.dot_dimension_numbers<[1], [0], [0], [1], [0, 0, 1, 1], [], []>} : vector<32x128xbf16>, vector<128x128xbf16>, vector<32x128xf32> -> vector<32x128xf32>
    %12 = arith.addf %8, %11 : vector<32x128xf32>
    %c0_11 = arith.constant 0 : index
    %c0_12 = arith.constant 0 : index
    %c0_13 = arith.constant 0 : index
    %13 = vector.load %arg4[%c0_11, %c0_12, %c0_13] : memref<3x1x128xf32, #tpu.memory_space<vmem>>, vector<1x1x128xf32>
    %14 = vector.shape_cast %13 : vector<1x1x128xf32> to vector<1x128xf32>
    %15 = vector.broadcast %14 : vector<1x128xf32> to vector<32x128xf32>
    %16 = arith.addf %12, %15 : vector<32x128xf32>
    %c0_14 = arith.constant 0 : index
    %c0_15 = arith.constant 0 : index
    %17 = vector.load %arg8[%c0_14, %c0_15] : memref<32x128xf32, #tpu.memory_space<vmem>>, vector<32x128xf32>
    tpu.vector_store %arg8[%c0_14, %c0_15], %16 {strides = array<i32>} : memref<32x128xf32, #tpu.memory_space<vmem>>, vector<32x128xf32>,
    %c0_16 = arith.constant 0 : index
    %c0_17 = arith.constant 0 : index
    %18 = tpu.strided_load %arg8[%c0_16, %c0_17] {strides = array<i32: 2, 1>} : memref<32x128xf32, #tpu.memory_space<vmem>>, vector<16x128xf32>
    %19 = arith.truncf %18 : vector<16x128xf32> to vector<16x128xbf16>
    %c1_18 = arith.constant 1 : index
    %c0_19 = arith.constant 0 : index
    %20 = tpu.strided_load %arg8[%c1_18, %c0_19] {strides = array<i32: 2, 1>} : memref<32x128xf32, #tpu.memory_space<vmem>>, vector<16x128xf32>
    %21 = arith.truncf %20 : vector<16x128xf32> to vector<16x128xbf16>
    %c1_20 = arith.constant 1 : index
    %c0_21 = arith.constant 0 : index
    %c0_22 = arith.constant 0 : index
    %22 = vector.load %arg2[%c1_20, %c0_21, %c0_22] : memref<3x128x128xbf16, #tpu.memory_space<vmem>>, vector<1x128x128xbf16>
    %23 = vector.shape_cast %22 : vector<1x128x128xbf16> to vector<128x128xbf16>
    %cst_23 = arith.constant dense<0.000000e+00> : vector<16x128xf32>
    %24 = tpu.matmul %19, %23, %cst_23 {dimension_numbers = #tpu.dot_dimension_numbers<[1], [0], [0], [1], [0, 0, 1, 1], [], []>} : vector<16x128xbf16>, vector<128x128xbf16>, vector<16x128xf32> -> vector<16x128xf32>
    %c1_24 = arith.constant 1 : index
    %c0_25 = arith.constant 0 : index
    %c0_26 = arith.constant 0 : index
    %25 = vector.load %arg3[%c1_24, %c0_25, %c0_26] : memref<3x128x128xbf16, #tpu.memory_space<vmem>>, vector<1x128x128xbf16>
    %26 = vector.shape_cast %25 : vector<1x128x128xbf16> to vector<128x128xbf16>
    %cst_27 = arith.constant dense<0.000000e+00> : vector<16x128xf32>
    %27 = tpu.matmul %21, %26, %cst_27 {dimension_numbers = #tpu.dot_dimension_numbers<[1], [0], [0], [1], [0, 0, 1, 1], [], []>} : vector<16x128xbf16>, vector<128x128xbf16>, vector<16x128xf32> -> vector<16x128xf32>
    %28 = arith.addf %24, %27 : vector<16x128xf32>
    %c1_28 = arith.constant 1 : index
    %c0_29 = arith.constant 0 : index
    %c0_30 = arith.constant 0 : index
    %29 = vector.load %arg4[%c1_28, %c0_29, %c0_30] : memref<3x1x128xf32, #tpu.memory_space<vmem>>, vector<1x1x128xf32>
    %30 = vector.shape_cast %29 : vector<1x1x128xf32> to vector<1x128xf32>
    %31 = vector.broadcast %30 : vector<1x128xf32> to vector<16x128xf32>
    %32 = arith.addf %28, %31 : vector<16x128xf32>
    %c0_31 = arith.constant 0 : index
    %c0_32 = arith.constant 0 : index
    %33 = vector.load %arg9[%c0_31, %c0_32] : memref<32x128xf32, #tpu.memory_space<vmem>>, vector<16x128xf32>
    tpu.vector_store %arg9[%c0_31, %c0_32], %32 {strides = array<i32>} : memref<32x128xf32, #tpu.memory_space<vmem>>, vector<16x128xf32>,
    %c0_33 = arith.constant 0 : index
    %c0_34 = arith.constant 0 : index
    %34 = tpu.strided_load %arg9[%c0_33, %c0_34] {strides = array<i32: 2, 1>} : memref<32x128xf32, #tpu.memory_space<vmem>>, vector<8x128xf32>
    %35 = arith.truncf %34 : vector<8x128xf32> to vector<8x128xbf16>
    %c1_35 = arith.constant 1 : index
    %c0_36 = arith.constant 0 : index
    %36 = tpu.strided_load %arg9[%c1_35, %c0_36] {strides = array<i32: 2, 1>} : memref<32x128xf32, #tpu.memory_space<vmem>>, vector<8x128xf32>
    %37 = arith.truncf %36 : vector<8x128xf32> to vector<8x128xbf16>
    %c2 = arith.constant 2 : index
    %c0_37 = arith.constant 0 : index
    %c0_38 = arith.constant 0 : index
    %38 = vector.load %arg2[%c2, %c0_37, %c0_38] : memref<3x128x128xbf16, #tpu.memory_space<vmem>>, vector<1x128x128xbf16>
    %39 = vector.shape_cast %38 : vector<1x128x128xbf16> to vector<128x128xbf16>
    %cst_39 = arith.constant dense<0.000000e+00> : vector<8x128xf32>
    %40 = tpu.matmul %35, %39, %cst_39 {dimension_numbers = #tpu.dot_dimension_numbers<[1], [0], [0], [1], [0, 0, 1, 1], [], []>} : vector<8x128xbf16>, vector<128x128xbf16>, vector<8x128xf32> -> vector<8x128xf32>
    %c2_40 = arith.constant 2 : index
    %c0_41 = arith.constant 0 : index
    %c0_42 = arith.constant 0 : index
    %41 = vector.load %arg3[%c2_40, %c0_41, %c0_42] : memref<3x128x128xbf16, #tpu.memory_space<vmem>>, vector<1x128x128xbf16>
    %42 = vector.shape_cast %41 : vector<1x128x128xbf16> to vector<128x128xbf16>
    %cst_43 = arith.constant dense<0.000000e+00> : vector<8x128xf32>
    %43 = tpu.matmul %37, %42, %cst_43 {dimension_numbers = #tpu.dot_dimension_numbers<[1], [0], [0], [1], [0, 0, 1, 1], [], []>} : vector<8x128xbf16>, vector<128x128xbf16>, vector<8x128xf32> -> vector<8x128xf32>
    %44 = arith.addf %40, %43 : vector<8x128xf32>
    %c2_44 = arith.constant 2 : index
    %c0_45 = arith.constant 0 : index
    %c0_46 = arith.constant 0 : index
    %45 = vector.load %arg4[%c2_44, %c0_45, %c0_46] : memref<3x1x128xf32, #tpu.memory_space<vmem>>, vector<1x1x128xf32>
    %46 = vector.shape_cast %45 : vector<1x1x128xf32> to vector<1x128xf32>
    %47 = vector.broadcast %46 : vector<1x128xf32> to vector<8x128xf32>
    %48 = arith.addf %44, %47 : vector<8x128xf32>
    %c0_47 = arith.constant 0 : index
    %c0_48 = arith.constant 0 : index
    %49 = vector.load %arg8[%c0_47, %c0_48] : memref<32x128xf32, #tpu.memory_space<vmem>>, vector<8x128xf32>
    tpu.vector_store %arg8[%c0_47, %c0_48], %48 {strides = array<i32>} : memref<32x128xf32, #tpu.memory_space<vmem>>, vector<8x128xf32>,
    %c0_49 = arith.constant 0 : index
    %c0_50 = arith.constant 0 : index
    %50 = vector.load %arg8[%c0_49, %c0_50] : memref<32x128xf32, #tpu.memory_space<vmem>>, vector<8x128xf32>
    %51 = arith.truncf %50 : vector<8x128xf32> to vector<8x128xbf16>
    %c0_51 = arith.constant 0 : index
    %c0_52 = arith.constant 0 : index
    %52 = vector.load %arg5[%c0_51, %c0_52] : memref<128x128xbf16, #tpu.memory_space<vmem>>, vector<128x128xbf16>
    %cst_53 = arith.constant dense<0.000000e+00> : vector<8x128xf32>
    %53 = tpu.matmul %51, %52, %cst_53 {dimension_numbers = #tpu.dot_dimension_numbers<[1], [0], [0], [1], [0, 0, 1, 1], [], []>} : vector<8x128xbf16>, vector<128x128xbf16>, vector<8x128xf32> -> vector<8x128xf32>
    %c0_54 = arith.constant 0 : index
    %c0_55 = arith.constant 0 : index
    %54 = vector.load %arg6[%c0_54, %c0_55] : memref<1x128xf32, #tpu.memory_space<vmem>>, vector<1x128xf32>
    %55 = vector.broadcast %54 : vector<1x128xf32> to vector<8x128xf32>
    %56 = arith.addf %53, %55 : vector<8x128xf32>
    %c0_56 = arith.constant 0 : index
    %c0_57 = arith.constant 0 : index
    %c0_58 = arith.constant 0 : index
    %57 = vector.load %arg7[%c0_56, %c0_57, %c0_58] : memref<1x8x128xf32, #tpu.memory_space<vmem>>, vector<1x8x128xf32>
    %58 = vector.shape_cast %57 : vector<1x8x128xf32> to vector<8x128xf32>
    %59 = vector.shape_cast %56 : vector<8x128xf32> to vector<1x8x128xf32>
    tpu.vector_store %arg7[%c0_56, %c0_57, %c0_58], %59 {strides = array<i32>} : memref<1x8x128xf32, #tpu.memory_space<vmem>>, vector<1x8x128xf32>,
    return
  }
  func.func @transform_0(%arg0: i32) -> (i32, i32, i32) {
    %c0_i32 = arith.constant 0 : i32
    %c0_i32_0 = arith.constant 0 : i32
    %c0_i32_1 = arith.constant 0 : i32
    return %arg0, %c0_i32, %c0_i32_0 : i32, i32, i32
  }
  func.func @transform_1(%arg0: i32) -> (i32, i32, i32) {
    %c0_i32 = arith.constant 0 : i32
    %c0_i32_0 = arith.constant 0 : i32
    %c0_i32_1 = arith.constant 0 : i32
    %c0_i32_2 = arith.constant 0 : i32
    return %c0_i32, %c0_i32_0, %c0_i32_1 : i32, i32, i32
  }
  func.func @transform_2(%arg0: i32) -> (i32, i32, i32) {
    %c0_i32 = arith.constant 0 : i32
    %c0_i32_0 = arith.constant 0 : i32
    %c0_i32_1 = arith.constant 0 : i32
    %c0_i32_2 = arith.constant 0 : i32
    return %c0_i32, %c0_i32_0, %c0_i32_1 : i32, i32, i32
  }
  func.func @transform_3(%arg0: i32) -> (i32, i32, i32) {
    %c0_i32 = arith.constant 0 : i32
    %c0_i32_0 = arith.constant 0 : i32
    %c0_i32_1 = arith.constant 0 : i32
    %c0_i32_2 = arith.constant 0 : i32
    return %c0_i32, %c0_i32_0, %c0_i32_1 : i32, i32, i32
  }
  func.func @transform_4(%arg0: i32) -> (i32, i32) {
    %c0_i32 = arith.constant 0 : i32
    %c0_i32_0 = arith.constant 0 : i32
    %c0_i32_1 = arith.constant 0 : i32
    return %c0_i32, %c0_i32_0 : i32, i32
  }
  func.func @transform_5(%arg0: i32) -> (i32, i32) {
    %c0_i32 = arith.constant 0 : i32
    %c0_i32_0 = arith.constant 0 : i32
    %c0_i32_1 = arith.constant 0 : i32
    return %c0_i32, %c0_i32_0 : i32, i32
  }
  func.func @transform_6(%arg0: i32) -> (i32, i32, i32) {
    %c0_i32 = arith.constant 0 : i32
    %c0_i32_0 = arith.constant 0 : i32
    %c0_i32_1 = arith.constant 0 : i32
    return %arg0, %c0_i32, %c0_i32_0 : i32, i32, i32
  }
}

module attributes {stable_mosaic.version = 11 : i64} {
  func.func @kernel(%arg0: i32, %arg1: memref<1x32x128xf32, #tpu.memory_space<vmem>>, %arg2: memref<3x128x128xbf16, #tpu.memory_space<vmem>>, %arg3: memref<3x128x128xbf16, #tpu.memory_space<vmem>>, %arg4: memref<3x1x128xf32, #tpu.memory_space<vmem>>, %arg5: memref<128x128xbf16, #tpu.memory_space<vmem>>, %arg6: memref<1x128xf32, #tpu.memory_space<vmem>>, %arg7: memref<1x4x128xf32, #tpu.memory_space<vmem>>, %arg8: memref<16x128xf32, #tpu.memory_space<vmem>>, %arg9: memref<16x128xf32, #tpu.memory_space<vmem>>) attributes {dimension_semantics = [#tpu.dimension_semantics<parallel>], iteration_bounds = array<i64: 1>, scalar_prefetch = 0 : i64, scratch_operands = 2 : i64, tpu.core_type = #tpu.core_type<tc>, window_params = [{transform_indices = @transform_0, window_bounds = array<i64: 1, 32, 128>}, {pipeline_mode = #tpu.pipeline_mode<synchronous>, transform_indices = @transform_1, window_bounds = array<i64: 3, 128, 128>}, {pipeline_mode = #tpu.pipeline_mode<synchronous>, transform_indices = @transform_2, window_bounds = array<i64: 3, 128, 128>}, {pipeline_mode = #tpu.pipeline_mode<synchronous>, transform_indices = @transform_3, window_bounds = array<i64: 3, 1, 128>}, {pipeline_mode = #tpu.pipeline_mode<synchronous>, transform_indices = @transform_4, window_bounds = array<i64: 128, 128>}, {pipeline_mode = #tpu.pipeline_mode<synchronous>, transform_indices = @transform_5, window_bounds = array<i64: 1, 128>}, {transform_indices = @transform_6, window_bounds = array<i64: 1, 4, 128>}]} {
    %c0 = arith.constant 0 : index
    %c0_0 = arith.constant 0 : index
    %c0_1 = arith.constant 0 : index
    %0 = tpu.strided_load %arg1[%c0, %c0_0, %c0_1] {strides = array<i32: 1, 2, 1>} : memref<1x32x128xf32, #tpu.memory_space<vmem>>, vector<1x16x128xf32>
    %1 = vector.shape_cast %0 : vector<1x16x128xf32> to vector<16x128xf32>
    %2 = arith.truncf %1 : vector<16x128xf32> to vector<16x128xbf16>
    %c0_2 = arith.constant 0 : index
    %c1 = arith.constant 1 : index
    %c0_3 = arith.constant 0 : index
    %3 = tpu.strided_load %arg1[%c0_2, %c1, %c0_3] {strides = array<i32: 1, 2, 1>} : memref<1x32x128xf32, #tpu.memory_space<vmem>>, vector<1x16x128xf32>
    %4 = vector.shape_cast %3 : vector<1x16x128xf32> to vector<16x128xf32>
    %5 = arith.truncf %4 : vector<16x128xf32> to vector<16x128xbf16>
    %c0_4 = arith.constant 0 : index
    %c0_5 = arith.constant 0 : index
    %c0_6 = arith.constant 0 : index
    %6 = vector.load %arg2[%c0_4, %c0_5, %c0_6] : memref<3x128x128xbf16, #tpu.memory_space<vmem>>, vector<1x128x128xbf16>
    %7 = vector.shape_cast %6 : vector<1x128x128xbf16> to vector<128x128xbf16>
    %cst = arith.constant dense<0.000000e+00> : vector<16x128xf32>
    %8 = tpu.matmul %2, %7, %cst {dimension_numbers = #tpu.dot_dimension_numbers<[1], [0], [0], [1], [0, 0, 1, 1], [], []>} : vector<16x128xbf16>, vector<128x128xbf16>, vector<16x128xf32> -> vector<16x128xf32>
    %c0_7 = arith.constant 0 : index
    %c0_8 = arith.constant 0 : index
    %c0_9 = arith.constant 0 : index
    %9 = vector.load %arg3[%c0_7, %c0_8, %c0_9] : memref<3x128x128xbf16, #tpu.memory_space<vmem>>, vector<1x128x128xbf16>
    %10 = vector.shape_cast %9 : vector<1x128x128xbf16> to vector<128x128xbf16>
    %cst_10 = arith.constant dense<0.000000e+00> : vector<16x128xf32>
    %11 = tpu.matmul %5, %10, %cst_10 {dimension_numbers = #tpu.dot_dimension_numbers<[1], [0], [0], [1], [0, 0, 1, 1], [], []>} : vector<16x128xbf16>, vector<128x128xbf16>, vector<16x128xf32> -> vector<16x128xf32>
    %12 = arith.addf %8, %11 : vector<16x128xf32>
    %c0_11 = arith.constant 0 : index
    %c0_12 = arith.constant 0 : index
    %c0_13 = arith.constant 0 : index
    %13 = vector.load %arg4[%c0_11, %c0_12, %c0_13] : memref<3x1x128xf32, #tpu.memory_space<vmem>>, vector<1x1x128xf32>
    %14 = vector.shape_cast %13 : vector<1x1x128xf32> to vector<1x128xf32>
    %15 = vector.broadcast %14 : vector<1x128xf32> to vector<16x128xf32>
    %16 = arith.addf %12, %15 : vector<16x128xf32>
    %c0_14 = arith.constant 0 : index
    %c0_15 = arith.constant 0 : index
    %17 = vector.load %arg8[%c0_14, %c0_15] : memref<16x128xf32, #tpu.memory_space<vmem>>, vector<16x128xf32>
    tpu.vector_store %arg8[%c0_14, %c0_15], %16 {strides = array<i32>} : memref<16x128xf32, #tpu.memory_space<vmem>>, vector<16x128xf32>,
    %c0_16 = arith.constant 0 : index
    %c0_17 = arith.constant 0 : index
    %18 = tpu.strided_load %arg8[%c0_16, %c0_17] {strides = array<i32: 2, 1>} : memref<16x128xf32, #tpu.memory_space<vmem>>, vector<8x128xf32>
    %19 = arith.truncf %18 : vector<8x128xf32> to vector<8x128xbf16>
    %c1_18 = arith.constant 1 : index
    %c0_19 = arith.constant 0 : index
    %20 = tpu.strided_load %arg8[%c1_18, %c0_19] {strides = array<i32: 2, 1>} : memref<16x128xf32, #tpu.memory_space<vmem>>, vector<8x128xf32>
    %21 = arith.truncf %20 : vector<8x128xf32> to vector<8x128xbf16>
    %c1_20 = arith.constant 1 : index
    %c0_21 = arith.constant 0 : index
    %c0_22 = arith.constant 0 : index
    %22 = vector.load %arg2[%c1_20, %c0_21, %c0_22] : memref<3x128x128xbf16, #tpu.memory_space<vmem>>, vector<1x128x128xbf16>
    %23 = vector.shape_cast %22 : vector<1x128x128xbf16> to vector<128x128xbf16>
    %cst_23 = arith.constant dense<0.000000e+00> : vector<8x128xf32>
    %24 = tpu.matmul %19, %23, %cst_23 {dimension_numbers = #tpu.dot_dimension_numbers<[1], [0], [0], [1], [0, 0, 1, 1], [], []>} : vector<8x128xbf16>, vector<128x128xbf16>, vector<8x128xf32> -> vector<8x128xf32>
    %c1_24 = arith.constant 1 : index
    %c0_25 = arith.constant 0 : index
    %c0_26 = arith.constant 0 : index
    %25 = vector.load %arg3[%c1_24, %c0_25, %c0_26] : memref<3x128x128xbf16, #tpu.memory_space<vmem>>, vector<1x128x128xbf16>
    %26 = vector.shape_cast %25 : vector<1x128x128xbf16> to vector<128x128xbf16>
    %cst_27 = arith.constant dense<0.000000e+00> : vector<8x128xf32>
    %27 = tpu.matmul %21, %26, %cst_27 {dimension_numbers = #tpu.dot_dimension_numbers<[1], [0], [0], [1], [0, 0, 1, 1], [], []>} : vector<8x128xbf16>, vector<128x128xbf16>, vector<8x128xf32> -> vector<8x128xf32>
    %28 = arith.addf %24, %27 : vector<8x128xf32>
    %c1_28 = arith.constant 1 : index
    %c0_29 = arith.constant 0 : index
    %c0_30 = arith.constant 0 : index
    %29 = vector.load %arg4[%c1_28, %c0_29, %c0_30] : memref<3x1x128xf32, #tpu.memory_space<vmem>>, vector<1x1x128xf32>
    %30 = vector.shape_cast %29 : vector<1x1x128xf32> to vector<1x128xf32>
    %31 = vector.broadcast %30 : vector<1x128xf32> to vector<8x128xf32>
    %32 = arith.addf %28, %31 : vector<8x128xf32>
    %c0_31 = arith.constant 0 : index
    %c0_32 = arith.constant 0 : index
    %33 = vector.load %arg9[%c0_31, %c0_32] : memref<16x128xf32, #tpu.memory_space<vmem>>, vector<8x128xf32>
    tpu.vector_store %arg9[%c0_31, %c0_32], %32 {strides = array<i32>} : memref<16x128xf32, #tpu.memory_space<vmem>>, vector<8x128xf32>,
    %c0_33 = arith.constant 0 : index
    %c0_34 = arith.constant 0 : index
    %34 = tpu.strided_load %arg9[%c0_33, %c0_34] {strides = array<i32: 2, 1>} : memref<16x128xf32, #tpu.memory_space<vmem>>, vector<4x128xf32>
    %35 = arith.truncf %34 : vector<4x128xf32> to vector<4x128xbf16>
    %c1_35 = arith.constant 1 : index
    %c0_36 = arith.constant 0 : index
    %36 = tpu.strided_load %arg9[%c1_35, %c0_36] {strides = array<i32: 2, 1>} : memref<16x128xf32, #tpu.memory_space<vmem>>, vector<4x128xf32>
    %37 = arith.truncf %36 : vector<4x128xf32> to vector<4x128xbf16>
    %c2 = arith.constant 2 : index
    %c0_37 = arith.constant 0 : index
    %c0_38 = arith.constant 0 : index
    %38 = vector.load %arg2[%c2, %c0_37, %c0_38] : memref<3x128x128xbf16, #tpu.memory_space<vmem>>, vector<1x128x128xbf16>
    %39 = vector.shape_cast %38 : vector<1x128x128xbf16> to vector<128x128xbf16>
    %cst_39 = arith.constant dense<0.000000e+00> : vector<4x128xf32>
    %40 = tpu.matmul %35, %39, %cst_39 {dimension_numbers = #tpu.dot_dimension_numbers<[1], [0], [0], [1], [0, 0, 1, 1], [], []>} : vector<4x128xbf16>, vector<128x128xbf16>, vector<4x128xf32> -> vector<4x128xf32>
    %c2_40 = arith.constant 2 : index
    %c0_41 = arith.constant 0 : index
    %c0_42 = arith.constant 0 : index
    %41 = vector.load %arg3[%c2_40, %c0_41, %c0_42] : memref<3x128x128xbf16, #tpu.memory_space<vmem>>, vector<1x128x128xbf16>
    %42 = vector.shape_cast %41 : vector<1x128x128xbf16> to vector<128x128xbf16>
    %cst_43 = arith.constant dense<0.000000e+00> : vector<4x128xf32>
    %43 = tpu.matmul %37, %42, %cst_43 {dimension_numbers = #tpu.dot_dimension_numbers<[1], [0], [0], [1], [0, 0, 1, 1], [], []>} : vector<4x128xbf16>, vector<128x128xbf16>, vector<4x128xf32> -> vector<4x128xf32>
    %44 = arith.addf %40, %43 : vector<4x128xf32>
    %c2_44 = arith.constant 2 : index
    %c0_45 = arith.constant 0 : index
    %c0_46 = arith.constant 0 : index
    %45 = vector.load %arg4[%c2_44, %c0_45, %c0_46] : memref<3x1x128xf32, #tpu.memory_space<vmem>>, vector<1x1x128xf32>
    %46 = vector.shape_cast %45 : vector<1x1x128xf32> to vector<1x128xf32>
    %47 = vector.broadcast %46 : vector<1x128xf32> to vector<4x128xf32>
    %48 = arith.addf %44, %47 : vector<4x128xf32>
    %c0_47 = arith.constant 0 : index
    %c0_48 = arith.constant 0 : index
    %49 = vector.load %arg8[%c0_47, %c0_48] : memref<16x128xf32, #tpu.memory_space<vmem>>, vector<4x128xf32>
    tpu.vector_store %arg8[%c0_47, %c0_48], %48 {strides = array<i32>} : memref<16x128xf32, #tpu.memory_space<vmem>>, vector<4x128xf32>,
    %c0_49 = arith.constant 0 : index
    %c0_50 = arith.constant 0 : index
    %50 = vector.load %arg8[%c0_49, %c0_50] : memref<16x128xf32, #tpu.memory_space<vmem>>, vector<4x128xf32>
    %51 = arith.truncf %50 : vector<4x128xf32> to vector<4x128xbf16>
    %c0_51 = arith.constant 0 : index
    %c0_52 = arith.constant 0 : index
    %52 = vector.load %arg5[%c0_51, %c0_52] : memref<128x128xbf16, #tpu.memory_space<vmem>>, vector<128x128xbf16>
    %cst_53 = arith.constant dense<0.000000e+00> : vector<4x128xf32>
    %53 = tpu.matmul %51, %52, %cst_53 {dimension_numbers = #tpu.dot_dimension_numbers<[1], [0], [0], [1], [0, 0, 1, 1], [], []>} : vector<4x128xbf16>, vector<128x128xbf16>, vector<4x128xf32> -> vector<4x128xf32>
    %c0_54 = arith.constant 0 : index
    %c0_55 = arith.constant 0 : index
    %54 = vector.load %arg6[%c0_54, %c0_55] : memref<1x128xf32, #tpu.memory_space<vmem>>, vector<1x128xf32>
    %55 = vector.broadcast %54 : vector<1x128xf32> to vector<4x128xf32>
    %56 = arith.addf %53, %55 : vector<4x128xf32>
    %c0_56 = arith.constant 0 : index
    %c0_57 = arith.constant 0 : index
    %c0_58 = arith.constant 0 : index
    %57 = vector.load %arg7[%c0_56, %c0_57, %c0_58] : memref<1x4x128xf32, #tpu.memory_space<vmem>>, vector<1x4x128xf32>
    %58 = vector.shape_cast %57 : vector<1x4x128xf32> to vector<4x128xf32>
    %59 = vector.shape_cast %56 : vector<4x128xf32> to vector<1x4x128xf32>
    tpu.vector_store %arg7[%c0_56, %c0_57, %c0_58], %59 {strides = array<i32>} : memref<1x4x128xf32, #tpu.memory_space<vmem>>, vector<1x4x128xf32>,
    return
  }
  func.func @transform_0(%arg0: i32) -> (i32, i32, i32) {
    %c0_i32 = arith.constant 0 : i32
    %c0_i32_0 = arith.constant 0 : i32
    %c0_i32_1 = arith.constant 0 : i32
    return %arg0, %c0_i32, %c0_i32_0 : i32, i32, i32
  }
  func.func @transform_1(%arg0: i32) -> (i32, i32, i32) {
    %c0_i32 = arith.constant 0 : i32
    %c0_i32_0 = arith.constant 0 : i32
    %c0_i32_1 = arith.constant 0 : i32
    %c0_i32_2 = arith.constant 0 : i32
    return %c0_i32, %c0_i32_0, %c0_i32_1 : i32, i32, i32
  }
  func.func @transform_2(%arg0: i32) -> (i32, i32, i32) {
    %c0_i32 = arith.constant 0 : i32
    %c0_i32_0 = arith.constant 0 : i32
    %c0_i32_1 = arith.constant 0 : i32
    %c0_i32_2 = arith.constant 0 : i32
    return %c0_i32, %c0_i32_0, %c0_i32_1 : i32, i32, i32
  }
  func.func @transform_3(%arg0: i32) -> (i32, i32, i32) {
    %c0_i32 = arith.constant 0 : i32
    %c0_i32_0 = arith.constant 0 : i32
    %c0_i32_1 = arith.constant 0 : i32
    %c0_i32_2 = arith.constant 0 : i32
    return %c0_i32, %c0_i32_0, %c0_i32_1 : i32, i32, i32
  }
  func.func @transform_4(%arg0: i32) -> (i32, i32) {
    %c0_i32 = arith.constant 0 : i32
    %c0_i32_0 = arith.constant 0 : i32
    %c0_i32_1 = arith.constant 0 : i32
    return %c0_i32, %c0_i32_0 : i32, i32
  }
  func.func @transform_5(%arg0: i32) -> (i32, i32) {
    %c0_i32 = arith.constant 0 : i32
    %c0_i32_0 = arith.constant 0 : i32
    %c0_i32_1 = arith.constant 0 : i32
    return %c0_i32, %c0_i32_0 : i32, i32
  }
  func.func @transform_6(%arg0: i32) -> (i32, i32, i32) {
    %c0_i32 = arith.constant 0 : i32
    %c0_i32_0 = arith.constant 0 : i32
    %c0_i32_1 = arith.constant 0 : i32
    return %arg0, %c0_i32, %c0_i32_0 : i32, i32, i32
  }
}

</mosaic_0001>

<llo_original>
// kernel: fwd.4
$region0: #{fwd.4}
  #allocation0 [shape = 'u32[]', space=smem, size = 0x4, offset = 0x4, fixed_abs, tag = 'smem constant byte address 0x4 - core index']
  #allocation1 [shape = 'u32[144,128]{1,0:T(1,128)}', space=vmem, size = 0x12000, scoped, tag = 'internal scratch']
  #allocation2 [shape = 'f32[8,128]{1,0:T(8,128)}', space=vmem, size = 0x1000, scoped, tag = 'scratch operand']
  #allocation3 [shape = 'f32[8,128]{1,0:T(8,128)}', space=vmem, size = 0x1000, scoped, tag = 'scratch operand']
  %s0 = inlined_call_operand.vmem [shape: f32[2,16,128], index: 0, kind: input, shape index: {}]
  %s1 = inlined_call_operand.vmem [shape: bf16[2,128,128], index: 1, kind: input, shape index: {}]
  %s2 = inlined_call_operand.vmem [shape: bf16[2,128,128], index: 2, kind: input, shape index: {}]
  %s3 = inlined_call_operand.vmem [shape: f32[2,1,128], index: 3, kind: input, shape index: {}]
  %s4 = inlined_call_operand.vmem [shape: bf16[128,128], index: 4, kind: input, shape index: {}]
  %s5 = inlined_call_operand.vmem [shape: f32[1,128], index: 5, kind: input, shape index: {}]
  %s6 = inlined_call_operand.vmem [shape: f32[2,4,128], index: 6, kind: output, shape index: {}]
  %s7 = sld [smem:[#allocation0]]
  $region57: #{fwd.4} parent=0
    _
  %s9 = ssub.s32 1, %s7
  %s10 = scalar_select 0, %s9, %s7
  loop: start=0, step=1, limit=4
  $region2: #{fwd.4} parent=0 // loop_pre_header
    _
  $region3: #{fwd.4} parent=0 // loop_header
    %s12 = sphi 0, %s16
    %p13 = scmp.ge.s32.totalorder %s12, 4
    %s22 = sphi 0, %s24
    %s25 = sphi 0, %s22
    %s26 = sphi 0, %s25
    %s42 = sphi 0, %s26
    %s46 = sphi 0, %s46
    %s48 = sphi 0, %s46
    %s49 = sphi 0, %s48
    %s63 = sphi 0, %s49
    %s67 = sphi 0, %s67
    %s69 = sphi 0, %s67
    %s70 = sphi 0, %s69
    %s84 = sphi 0, %s70
    %s88 = sphi 0, %s88
    %s90 = sphi 0, %s88
    %s91 = sphi 0, %s90
    %s105 = sphi 0, %s91
    %s109 = sphi 0, %s109
    %s111 = sphi 0, %s109
    %s112 = sphi 0, %s111
    %s126 = sphi 0, %s112
    %s130 = sphi 0, %s130
    %s132 = sphi 0, %s130
    %s133 = sphi 0, %s132
    %s147 = sphi 0, %s133
    %s153 = sphi 0, %s155
    %s156 = sphi 0, %s153
    %s157 = sphi 0, %s156
    %s173 = sphi 0, %s157
  $region4: #{fwd.4} parent=0 // loop_header_branch
    %15 = sbr.rel (%p13) target = $region8
  $region5: #{fwd.4} parent=0 // loop_body
    %s17 = ssub.s32 %s12, 1
    %s18 = ssub.s32 %s12, 2
    %s19 = sadd.s32 %s12, 1
    %s20 = ssub.s32 %s12, %s19
    %p21 = scmp.eq.s32.totalorder %s20, 0
    %s23 = sadd.s32 %s22, 1
    %s24 = scalar_select %p21, %s22, %s23
    %p27 = pneg %p21
    %p28 = scmp.eq.s32.totalorder %s12, 1
    %p29 = por %p27, %p28
    %p30 = scmp.ne.s32.totalorder %s22, %s25
    %p31 = scmp.eq.s32.totalorder %s12, 0
    %p32 = por %p30, %p31
    %p33 = scmp.ne.s32.totalorder %s22, %s25
    %p34 = scmp.eq.s32.totalorder %s17, 1
    %p35 = por %p33, %p34
    %p36 = scmp.ne.s32.totalorder %s25, %s26
    %p37 = scmp.eq.s32.totalorder %s17, 0
    %p38 = por %p36, %p37
    %p39 = scmp.ne.s32.totalorder %s25, %s26
    %p40 = scmp.eq.s32.totalorder %s18, 1
    %p41 = por %p39, %p40
    %p43 = scmp.ne.s32.totalorder %s26, %s42
    %p44 = scmp.eq.s32.totalorder %s18, 0
    %p45 = por %p43, %p44
    %s47 = sadd.s32 %s46, 1
    %p50 = scmp.eq.s32.totalorder %s12, 1
    %p51 = scmp.ne.s32.totalorder %s46, %s48
    %p52 = scmp.eq.s32.totalorder %s12, 0
    %p53 = por %p51, %p52
    %p54 = scmp.ne.s32.totalorder %s46, %s48
    %p55 = scmp.eq.s32.totalorder %s17, 1
    %p56 = por %p54, %p55
    %p57 = scmp.ne.s32.totalorder %s48, %s49
    %p58 = scmp.eq.s32.totalorder %s17, 0
    %p59 = por %p57, %p58
    %p60 = scmp.ne.s32.totalorder %s48, %s49
    %p61 = scmp.eq.s32.totalorder %s18, 1
    %p62 = por %p60, %p61
    %p64 = scmp.ne.s32.totalorder %s49, %s63
    %p65 = scmp.eq.s32.totalorder %s18, 0
    %p66 = por %p64, %p65
    %s68 = sadd.s32 %s67, 1
    %p71 = scmp.eq.s32.totalorder %s12, 1
    %p72 = scmp.ne.s32.totalorder %s67, %s69
    %p73 = scmp.eq.s32.totalorder %s12, 0
    %p74 = por %p72, %p73
    %p75 = scmp.ne.s32.totalorder %s67, %s69
    %p76 = scmp.eq.s32.totalorder %s17, 1
    %p77 = por %p75, %p76
    %p78 = scmp.ne.s32.totalorder %s69, %s70
    %p79 = scmp.eq.s32.totalorder %s17, 0
    %p80 = por %p78, %p79
    %p81 = scmp.ne.s32.totalorder %s69, %s70
    %p82 = scmp.eq.s32.totalorder %s18, 1
    %p83 = por %p81, %p82
    %p85 = scmp.ne.s32.totalorder %s70, %s84
    %p86 = scmp.eq.s32.totalorder %s18, 0
    %p87 = por %p85, %p86
    %s89 = sadd.s32 %s88, 1
    %p92 = scmp.eq.s32.totalorder %s12, 1
    %p93 = scmp.ne.s32.totalorder %s88, %s90
    %p94 = scmp.eq.s32.totalorder %s12, 0
    %p95 = por %p93, %p94
    %p96 = scmp.ne.s32.totalorder %s88, %s90
    %p97 = scmp.eq.s32.totalorder %s17, 1
    %p98 = por %p96, %p97
    %p99 = scmp.ne.s32.totalorder %s90, %s91
    %p100 = scmp.eq.s32.totalorder %s17, 0
    %p101 = por %p99, %p100
    %p102 = scmp.ne.s32.totalorder %s90, %s91
    %p103 = scmp.eq.s32.totalorder %s18, 1
    %p104 = por %p102, %p103
    %p106 = scmp.ne.s32.totalorder %s91, %s105
    %p107 = scmp.eq.s32.totalorder %s18, 0
    %p108 = por %p106, %p107
    %s110 = sadd.s32 %s109, 1
    %p113 = scmp.eq.s32.totalorder %s12, 1
    %p114 = scmp.ne.s32.totalorder %s109, %s111
    %p115 = scmp.eq.s32.totalorder %s12, 0
    %p116 = por %p114, %p115
    %p117 = scmp.ne.s32.totalorder %s109, %s111
    %p118 = scmp.eq.s32.totalorder %s17, 1
    %p119 = por %p117, %p118
    %p120 = scmp.ne.s32.totalorder %s111, %s112
    %p121 = scmp.eq.s32.totalorder %s17, 0
    %p122 = por %p120, %p121
    %p123 = scmp.ne.s32.totalorder %s111, %s112
    %p124 = scmp.eq.s32.totalorder %s18, 1
    %p125 = por %p123, %p124
    %p127 = scmp.ne.s32.totalorder %s112, %s126
    %p128 = scmp.eq.s32.totalorder %s18, 0
    %p129 = por %p127, %p128
    %s131 = sadd.s32 %s130, 1
    %p134 = scmp.eq.s32.totalorder %s12, 1
    %p135 = scmp.ne.s32.totalorder %s130, %s132
    %p136 = scmp.eq.s32.totalorder %s12, 0
    %p137 = por %p135, %p136
    %p138 = scmp.ne.s32.totalorder %s130, %s132
    %p139 = scmp.eq.s32.totalorder %s17, 1
    %p140 = por %p138, %p139
    %p141 = scmp.ne.s32.totalorder %s132, %s133
    %p142 = scmp.eq.s32.totalorder %s17, 0
    %p143 = por %p141, %p142
    %p144 = scmp.ne.s32.totalorder %s132, %s133
    %p145 = scmp.eq.s32.totalorder %s18, 1
    %p146 = por %p144, %p145
    %p148 = scmp.ne.s32.totalorder %s133, %s147
    %p149 = scmp.eq.s32.totalorder %s18, 0
    %p150 = por %p148, %p149
    %s151 = ssub.s32 %s12, %s19
    %p152 = scmp.eq.s32.totalorder %s151, 0
    %s154 = sadd.s32 %s153, 1
    %s155 = scalar_select %p152, %s153, %s154
    %p158 = pneg %p152
    %p159 = scmp.eq.s32.totalorder %s12, 1
    %p160 = por %p158, %p159
    %p161 = scmp.ne.s32.totalorder %s153, %s156
    %p162 = scmp.eq.s32.totalorder %s12, 0
    %p163 = por %p161, %p162
    %p164 = scmp.ne.s32.totalorder %s153, %s156
    %p165 = scmp.eq.s32.totalorder %s17, 1
    %p166 = por %p164, %p165
    %p167 = scmp.ne.s32.totalorder %s156, %s157
    %p168 = scmp.eq.s32.totalorder %s17, 0
    %p169 = por %p167, %p168
    %p170 = scmp.ne.s32.totalorder %s156, %s157
    %p171 = scmp.eq.s32.totalorder %s18, 1
    %p172 = por %p170, %p171
    %p174 = scmp.ne.s32.totalorder %s157, %s173
    %p175 = scmp.eq.s32.totalorder %s18, 0
    %p176 = por %p174, %p175
    %p177 = scmp.le.s32.totalorder 1, %s12
    %p178 = scmp.lt.s32.totalorder %s12, 3
    %p179 = pnand %p177, %p178
    %p180 = pneg %p179
    // Predicated region
    $region9: #{fwd.4} parent=5 // pred_check
      _
    $region10: #{fwd.4} parent=5 // pred_check_branch
      %182 = sbr.rel (%p179) target = $region12
    $region11: #{fwd.4} parent=5 // pred_region
      %s183 = ssub.s32 %s12, 1
      // Predicated region
      $region13: #{fwd.4} parent=11 // pred_check
        %p184 = pneg %p59
      $region14: #{fwd.4} parent=11 // pred_check_branch
        %186 = sbr.rel (%p184) target = $region16
      $region15: #{fwd.4} parent=11 // pred_region
        _
      $region16: #{fwd.4} parent=11 // pred_fallthru
        _
      // Predicated region
      $region17: #{fwd.4} parent=11 // pred_check
        %p187 = pneg %p80
      $region18: #{fwd.4} parent=11 // pred_check_branch
        %189 = sbr.rel (%p187) target = $region20
      $region19: #{fwd.4} parent=11 // pred_region
        _
      $region20: #{fwd.4} parent=11 // pred_fallthru
        _
      // Predicated region
      $region21: #{fwd.4} parent=11 // pred_check
        %p190 = pneg %p101
      $region22: #{fwd.4} parent=11 // pred_check_branch
        %192 = sbr.rel (%p190) target = $region24
      $region23: #{fwd.4} parent=11 // pred_region
        _
      $region24: #{fwd.4} parent=11 // pred_fallthru
        _
      // Predicated region
      $region25: #{fwd.4} parent=11 // pred_check
        %p193 = pneg %p122
      $region26: #{fwd.4} parent=11 // pred_check_branch
        %195 = sbr.rel (%p193) target = $region28
      $region27: #{fwd.4} parent=11 // pred_region
        _
      $region28: #{fwd.4} parent=11 // pred_fallthru
        _
      // Predicated region
      $region29: #{fwd.4} parent=11 // pred_check
        %p196 = pneg %p143
      $region30: #{fwd.4} parent=11 // pred_check_branch
        %198 = sbr.rel (%p196) target = $region32
      $region31: #{fwd.4} parent=11 // pred_region
        _
      $region32: #{fwd.4} parent=11 // pred_fallthru
        _
    $region12: #{fwd.4} parent=5 // pred_fallthru
      _
    %p199 = scmp.lt.s32.totalorder %s12, 2
    // Predicated region
    $region33: #{fwd.4} parent=5 // pred_check
      %p200 = pneg %p199
    $region34: #{fwd.4} parent=5 // pred_check_branch
      %202 = sbr.rel (%p200) target = $region36
    $region35: #{fwd.4} parent=5 // pred_region
      // Predicated region
      $region37: #{fwd.4} parent=35 // pred_check
        %p203 = pneg %p32
      $region38: #{fwd.4} parent=35 // pred_check_branch
        %205 = sbr.rel (%p203) target = $region40
      $region39: #{fwd.4} parent=35 // pred_region
        %p206 = scmp.lt.s32.totalorder %s12, 1
        %s207 = scalar_select %p206, %s12, 1
        %s208 = smul.addr %s207, 2
        %s209 = smul.addr %s208, 8
        %s210 = scalar_lea.vmem %s0, %s209
      $region40: #{fwd.4} parent=35 // pred_fallthru
        _
    $region36: #{fwd.4} parent=5 // pred_fallthru
      _
    %p211 = scmp.le.s32.totalorder 1, %s12
    %p212 = scmp.lt.s32.totalorder %s12, 3
    %p213 = pnand %p211, %p212
    %p214 = pneg %p213
    // Predicated region
    $region41: #{fwd.4} parent=5 // pred_check
      _
    $region42: #{fwd.4} parent=5 // pred_check_branch
      %216 = sbr.rel (%p213) target = $region44
    $region43: #{fwd.4} parent=5 // pred_region
      %s217 = ssub.s32 %s12, 1
      %p218 = scmp.lt.s32.totalorder %s17, 1
      %s219 = scalar_select %p218, %s17, 1
      %s220 = smul.addr %s219, 2
      %s221 = smul.addr %s220, 8
      %s222 = scalar_lea.vmem %s0, %s221
      %p223 = pneg %p38
      %p224 = pneg %p35
      %p225 = pneg %p59
      %p226 = pneg %p56
      %p227 = pneg %p80
      %p228 = pneg %p77
      %p229 = pneg %p101
      %p230 = pneg %p98
      %p231 = pneg %p122
      %p232 = pneg %p119
      %p233 = pneg %p143
      %p234 = pneg %p140
      %p235 = pneg %p169
      %p236 = pneg %p166
      %p237 = scmp.lt.s32.totalorder %s17, 1
      %s238 = scalar_select %p237, %s17, 1
      %s239 = smul.addr %s238, 4
      %s240 = scalar_lea.vmem %s6, %s239
      %p241 = scmp.lt.s32.totalorder %s17, 1
      %s242 = scalar_select %p241, %s17, 1
      %s243 = smul.addr %s242, 2
      %s244 = smul.addr %s243, 8
      %s245 = scalar_lea.vmem %s0, %s244
      %p246 = scmp.lt.s32.totalorder %s17, 1
      %s247 = scalar_select %p246, %s17, 1
      %s248 = smul.addr %s247, 4
      %s249 = scalar_lea.vmem %s6, %s248
      %v251 = vld [vmem:[%s245] ss:$2 sm:$0xff]
      %v252 = vpack.c.bf16 %v251, %v251
      %s253 = scalar_lea.vmem %s245, 1
      %v254 = vld [vmem:[%s253] ss:$2 sm:$0xff]
      %v255 = vpack.c.bf16 %v254, %v254
      %v256 = vld [vmem:[%s1] sm:$0xf]
      %v257 = vld [vmem:[%s1 + $0x4] sm:$0xf]
      %v258 = vld [vmem:[%s1 + $0x8] sm:$0xf]
      %v259 = vld [vmem:[%s1 + $0xc] sm:$0xf]
      %v260 = vld [vmem:[%s1 + $0x10] sm:$0xf]
      %v261 = vld [vmem:[%s1 + $0x14] sm:$0xf]
      %v262 = vld [vmem:[%s1 + $0x18] sm:$0xf]
      %v263 = vld [vmem:[%s1 + $0x1c] sm:$0xf]
      %v264 = vld [vmem:[%s1 + $0x20] sm:$0xf]
      %v265 = vld [vmem:[%s1 + $0x24] sm:$0xf]
      %v266 = vld [vmem:[%s1 + $0x28] sm:$0xf]
      %v267 = vld [vmem:[%s1 + $0x2c] sm:$0xf]
      %v268 = vld [vmem:[%s1 + $0x30] sm:$0xf]
      %v269 = vld [vmem:[%s1 + $0x34] sm:$0xf]
      %v270 = vld [vmem:[%s1 + $0x38] sm:$0xf]
      %v271 = vld [vmem:[%s1 + $0x3c] sm:$0xf]
      %v272 = vld [vmem:[%s2] sm:$0xf]
      %v273 = vld [vmem:[%s2 + $0x4] sm:$0xf]
      %v274 = vld [vmem:[%s2 + $0x8] sm:$0xf]
      %v275 = vld [vmem:[%s2 + $0xc] sm:$0xf]
      %v276 = vld [vmem:[%s2 + $0x10] sm:$0xf]
      %v277 = vld [vmem:[%s2 + $0x14] sm:$0xf]
      %v278 = vld [vmem:[%s2 + $0x18] sm:$0xf]
      %v279 = vld [vmem:[%s2 + $0x1c] sm:$0xf]
      %v280 = vld [vmem:[%s2 + $0x20] sm:$0xf]
      %v281 = vld [vmem:[%s2 + $0x24] sm:$0xf]
      %v282 = vld [vmem:[%s2 + $0x28] sm:$0xf]
      %v283 = vld [vmem:[%s2 + $0x2c] sm:$0xf]
      %v284 = vld [vmem:[%s2 + $0x30] sm:$0xf]
      %v285 = vld [vmem:[%s2 + $0x34] sm:$0xf]
      %v286 = vld [vmem:[%s2 + $0x38] sm:$0xf]
      %v287 = vld [vmem:[%s2 + $0x3c] sm:$0xf]
      %v304 = vunpack.c.l.b16 %v272
      %v305 = vunpack.c.l.b16 %v273
      %v306 = vunpack.c.l.b16 %v274
      %v307 = vunpack.c.l.b16 %v275
      %v308 = vunpack.c.l.b16 %v276
      %v309 = vunpack.c.l.b16 %v277
      %v310 = vunpack.c.l.b16 %v278
      %v311 = vunpack.c.l.b16 %v279
      %v312 = vunpack.c.l.b16 %v280
      %v313 = vunpack.c.l.b16 %v281
      %v314 = vunpack.c.l.b16 %v282
      %v315 = vunpack.c.l.b16 %v283
      %v316 = vunpack.c.l.b16 %v284
      %v317 = vunpack.c.l.b16 %v285
      %v318 = vunpack.c.l.b16 %v286
      %v319 = vunpack.c.l.b16 %v287
      %v320 = vpack.c.b16 %v305, %v304
      %v321 = vpack.c.b16 %v307, %v306
      %v322 = vpack.c.b16 %v309, %v308
      %v323 = vpack.c.b16 %v311, %v310
      %v324 = vpack.c.b16 %v313, %v312
      %v325 = vpack.c.b16 %v315, %v314
      %v326 = vpack.c.b16 %v317, %v316
      %v327 = vpack.c.b16 %v319, %v318
      %336 = vmatprep.subr.bf16.mxu0 0
      %337 = vmatpush1.bf16.msra.mxu0 %v327
      %338 = vmatprep.subr.bf16.mxu0 0
      %339 = vmatpush1.bf16.msra.mxu0 %v326
      %340 = vmatprep.subr.bf16.mxu0 0
      %341 = vmatpush1.bf16.msra.mxu0 %v325
      %342 = vmatprep.subr.bf16.mxu0 0
      %343 = vmatpush1.bf16.msra.mxu0 %v324
      %344 = vmatprep.subr.bf16.mxu0 0
      %345 = vmatpush1.bf16.msra.mxu0 %v323
      %346 = vmatprep.subr.bf16.mxu0 0
      %347 = vmatpush1.bf16.msra.mxu0 %v322
      %348 = vmatprep.subr.bf16.mxu0 0
      %349 = vmatpush1.bf16.msra.mxu0 %v321
      %350 = vmatprep.subr.bf16.mxu0 0
      %351 = vmatpush1.bf16.msra.mxu0 %v320
      %352 = vmatprep.subr.bf16.mxu0 0
      %353 = vmatpush2.bf16.msra.mxu0 0
      %354 = vmatprep.subr.bf16.mxu0 0
      %355 = vmatpush2.bf16.msra.mxu0 0
      %356 = vmatprep.subr.bf16.mxu0 0
      %357 = vmatpush2.bf16.msra.mxu0 0
      %358 = vmatprep.subr.bf16.mxu0 0
      %359 = vmatpush2.bf16.msra.mxu0 0
      %360 = vmatprep.subr.bf16.mxu0 0
      %361 = vmatpush2.bf16.msra.mxu0 0
      %362 = vmatprep.subr.bf16.mxu0 0
      %363 = vmatpush2.bf16.msra.mxu0 0
      %364 = vmatprep.subr.bf16.mxu0 0
      %365 = vmatpush2.bf16.msra.mxu0 0
      %366 = vmatprep.subr.bf16.mxu0 0
      %367 = vmatpush2.bf16.msra.mxu0 0
      %368 = vmatprep.mubr.bf16.mxu0 0
      %369 = vmatmul.mubr.bf16.gmra.mxu0 %v255
      %v370 = vpop.f32.mrf.mxu0
      %v371 = vadd.f32 0.0, %v370
      %v372 = vpop.f32.mrf.mxu0
      %v373 = vpop.f32.mrf.mxu0
      %v374 = vpop.f32.mrf.mxu0
      %375 = vdwg.mxu0
      %v392 = vunpack.c.l.b16 %v256
      %v393 = vunpack.c.l.b16 %v257
      %v394 = vunpack.c.l.b16 %v258
      %v395 = vunpack.c.l.b16 %v259
      %v396 = vunpack.c.l.b16 %v260
      %v397 = vunpack.c.l.b16 %v261
      %v398 = vunpack.c.l.b16 %v262
      %v399 = vunpack.c.l.b16 %v263
      %v400 = vunpack.c.l.b16 %v264
      %v401 = vunpack.c.l.b16 %v265
      %v402 = vunpack.c.l.b16 %v266
      %v403 = vunpack.c.l.b16 %v267
      %v404 = vunpack.c.l.b16 %v268
      %v405 = vunpack.c.l.b16 %v269
      %v406 = vunpack.c.l.b16 %v270
      %v407 = vunpack.c.l.b16 %v271
      %v408 = vpack.c.b16 %v393, %v392
      %v409 = vpack.c.b16 %v395, %v394
      %v410 = vpack.c.b16 %v397, %v396
      %v411 = vpack.c.b16 %v399, %v398
      %v412 = vpack.c.b16 %v401, %v400
      %v413 = vpack.c.b16 %v403, %v402
      %v414 = vpack.c.b16 %v405, %v404
      %v415 = vpack.c.b16 %v407, %v406
      %424 = vmatprep.subr.bf16.mxu0 0
      %425 = vmatpush1.bf16.msra.mxu0 %v415
      %426 = vmatprep.subr.bf16.mxu0 0
      %427 = vmatpush1.bf16.msra.mxu0 %v414
      %428 = vmatprep.subr.bf16.mxu0 0
      %429 = vmatpush1.bf16.msra.mxu0 %v413
      %430 = vmatprep.subr.bf16.mxu0 0
      %431 = vmatpush1.bf16.msra.mxu0 %v412
      %432 = vmatprep.subr.bf16.mxu0 0
      %433 = vmatpush1.bf16.msra.mxu0 %v411
      %434 = vmatprep.subr.bf16.mxu0 0
      %435 = vmatpush1.bf16.msra.mxu0 %v410
      %436 = vmatprep.subr.bf16.mxu0 0
      %437 = vmatpush1.bf16.msra.mxu0 %v409
      %438 = vmatprep.subr.bf16.mxu0 0
      %439 = vmatpush1.bf16.msra.mxu0 %v408
      %440 = vmatprep.subr.bf16.mxu0 0
      %441 = vmatpush2.bf16.msra.mxu0 0
      %442 = vmatprep.subr.bf16.mxu0 0
      %443 = vmatpush2.bf16.msra.mxu0 0
      %444 = vmatprep.subr.bf16.mxu0 0
      %445 = vmatpush2.bf16.msra.mxu0 0
      %446 = vmatprep.subr.bf16.mxu0 0
      %447 = vmatpush2.bf16.msra.mxu0 0
      %448 = vmatprep.subr.bf16.mxu0 0
      %449 = vmatpush2.bf16.msra.mxu0 0
      %450 = vmatprep.subr.bf16.mxu0 0
      %451 = vmatpush2.bf16.msra.mxu0 0
      %452 = vmatprep.subr.bf16.mxu0 0
      %453 = vmatpush2.bf16.msra.mxu0 0
      %454 = vmatprep.subr.bf16.mxu0 0
      %455 = vmatpush2.bf16.msra.mxu0 0
      %456 = vmatprep.mubr.bf16.mxu0 0
      %457 = vmatmul.mubr.bf16.gmra.mxu0 %v252
      %v458 = vpop.f32.mrf.mxu0
      %v459 = vadd.f32 %v371, %v458
      %v460 = vpop.f32.mrf.mxu0
      %v461 = vpop.f32.mrf.mxu0
      %v462 = vpop.f32.mrf.mxu0
      %463 = vdwg.mxu0
      %v464 = vld [vmem:[%s3] sm:$0x1]
      %v466 = vlaneseq
      %v467 = vshrl.u32 %v466, 7
      %v468 = vsub.s32 0, %v467
      %v469 = vrot.slane %v464, %v468
      %v471 = vadd.f32 %v459, %v469
      %472 = vst [vmem:[#allocation2] sm:$0xff] %v471
      %v473 = vld [vmem:[#allocation2] ss:$2 sm:$0xf]
      %v474 = vpack.c.bf16 %v473, %v473
      %s475 = scalar_lea.vmem [#allocation2], 1
      %v476 = vld [vmem:[%s475] ss:$2 sm:$0xf]
      %v477 = vpack.c.bf16 %v476, %v476
      %s478 = scalar_lea.vmem %s1, 64
      %v479 = vld [vmem:[%s478] sm:$0xf]
      %v480 = vld [vmem:[%s478 + $0x4] sm:$0xf]
      %v481 = vld [vmem:[%s478 + $0x8] sm:$0xf]
      %v482 = vld [vmem:[%s478 + $0xc] sm:$0xf]
      %v483 = vld [vmem:[%s478 + $0x10] sm:$0xf]
      %v484 = vld [vmem:[%s478 + $0x14] sm:$0xf]
      %v485 = vld [vmem:[%s478 + $0x18] sm:$0xf]
      %v486 = vld [vmem:[%s478 + $0x1c] sm:$0xf]
      %v487 = vld [vmem:[%s478 + $0x20] sm:$0xf]
      %v488 = vld [vmem:[%s478 + $0x24] sm:$0xf]
      %v489 = vld [vmem:[%s478 + $0x28] sm:$0xf]
      %v490 = vld [vmem:[%s478 + $0x2c] sm:$0xf]
      %v491 = vld [vmem:[%s478 + $0x30] sm:$0xf]
      %v492 = vld [vmem:[%s478 + $0x34] sm:$0xf]
      %v493 = vld [vmem:[%s478 + $0x38] sm:$0xf]
      %v494 = vld [vmem:[%s478 + $0x3c] sm:$0xf]
      %s495 = scalar_lea.vmem %s2, 64
      %v496 = vld [vmem:[%s495] sm:$0xf]
      %v497 = vld [vmem:[%s495 + $0x4] sm:$0xf]
      %v498 = vld [vmem:[%s495 + $0x8] sm:$0xf]
      %v499 = vld [vmem:[%s495 + $0xc] sm:$0xf]
      %v500 = vld [vmem:[%s495 + $0x10] sm:$0xf]
      %v501 = vld [vmem:[%s495 + $0x14] sm:$0xf]
      %v502 = vld [vmem:[%s495 + $0x18] sm:$0xf]
      %v503 = vld [vmem:[%s495 + $0x1c] sm:$0xf]
      %v504 = vld [vmem:[%s495 + $0x20] sm:$0xf]
      %v505 = vld [vmem:[%s495 + $0x24] sm:$0xf]
      %v506 = vld [vmem:[%s495 + $0x28] sm:$0xf]
      %v507 = vld [vmem:[%s495 + $0x2c] sm:$0xf]
      %v508 = vld [vmem:[%s495 + $0x30] sm:$0xf]
      %v509 = vld [vmem:[%s495 + $0x34] sm:$0xf]
      %v510 = vld [vmem:[%s495 + $0x38] sm:$0xf]
      %v511 = vld [vmem:[%s495 + $0x3c] sm:$0xf]
      %v528 = vunpack.c.l.b16 %v496
      %v529 = vunpack.c.l.b16 %v497
      %v530 = vunpack.c.l.b16 %v498
      %v531 = vunpack.c.l.b16 %v499
      %v532 = vunpack.c.l.b16 %v500
      %v533 = vunpack.c.l.b16 %v501
      %v534 = vunpack.c.l.b16 %v502
      %v535 = vunpack.c.l.b16 %v503
      %v536 = vunpack.c.l.b16 %v504
      %v537 = vunpack.c.l.b16 %v505
      %v538 = vunpack.c.l.b16 %v506
      %v539 = vunpack.c.l.b16 %v507
      %v540 = vunpack.c.l.b16 %v508
      %v541 = vunpack.c.l.b16 %v509
      %v542 = vunpack.c.l.b16 %v510
      %v543 = vunpack.c.l.b16 %v511
      %v544 = vpack.c.b16 %v529, %v528
      %v545 = vpack.c.b16 %v531, %v530
      %v546 = vpack.c.b16 %v533, %v532
      %v547 = vpack.c.b16 %v535, %v534
      %v548 = vpack.c.b16 %v537, %v536
      %v549 = vpack.c.b16 %v539, %v538
      %v550 = vpack.c.b16 %v541, %v540
      %v551 = vpack.c.b16 %v543, %v542
      %560 = vmatprep.subr.bf16.mxu0 0
      %561 = vmatpush1.bf16.msra.mxu0 %v551
      %562 = vmatprep.subr.bf16.mxu0 0
      %563 = vmatpush1.bf16.msra.mxu0 %v550
      %564 = vmatprep.subr.bf16.mxu0 0
      %565 = vmatpush1.bf16.msra.mxu0 %v549
      %566 = vmatprep.subr.bf16.mxu0 0
      %567 = vmatpush1.bf16.msra.mxu0 %v548
      %568 = vmatprep.subr.bf16.mxu0 0
      %569 = vmatpush1.bf16.msra.mxu0 %v547
      %570 = vmatprep.subr.bf16.mxu0 0
      %571 = vmatpush1.bf16.msra.mxu0 %v546
      %572 = vmatprep.subr.bf16.mxu0 0
      %573 = vmatpush1.bf16.msra.mxu0 %v545
      %574 = vmatprep.subr.bf16.mxu0 0
      %575 = vmatpush1.bf16.msra.mxu0 %v544
      %576 = vmatprep.subr.bf16.mxu0 0
      %577 = vmatpush2.bf16.msra.mxu0 0
      %578 = vmatprep.subr.bf16.mxu0 0
      %579 = vmatpush2.bf16.msra.mxu0 0
      %580 = vmatprep.subr.bf16.mxu0 0
      %581 = vmatpush2.bf16.msra.mxu0 0
      %582 = vmatprep.subr.bf16.mxu0 0
      %583 = vmatpush2.bf16.msra.mxu0 0
      %584 = vmatprep.subr.bf16.mxu0 0
      %585 = vmatpush2.bf16.msra.mxu0 0
      %586 = vmatprep.subr.bf16.mxu0 0
      %587 = vmatpush2.bf16.msra.mxu0 0
      %588 = vmatprep.subr.bf16.mxu0 0
      %589 = vmatpush2.bf16.msra.mxu0 0
      %590 = vmatprep.subr.bf16.mxu0 0
      %591 = vmatpush2.bf16.msra.mxu0 0
      %592 = vmatprep.mubr.bf16.mxu0 0
      %593 = vmatmul.mubr.bf16.gmra.mxu0 %v477
      %v594 = vpop.f32.mrf.mxu0
      %v595 = vadd.f32 0.0, %v594
      %v596 = vpop.f32.mrf.mxu0
      %v597 = vpop.f32.mrf.mxu0
      %v598 = vpop.f32.mrf.mxu0
      %599 = vdwg.mxu0
      %v616 = vunpack.c.l.b16 %v479
      %v617 = vunpack.c.l.b16 %v480
      %v618 = vunpack.c.l.b16 %v481
      %v619 = vunpack.c.l.b16 %v482
      %v620 = vunpack.c.l.b16 %v483
      %v621 = vunpack.c.l.b16 %v484
      %v622 = vunpack.c.l.b16 %v485
      %v623 = vunpack.c.l.b16 %v486
      %v624 = vunpack.c.l.b16 %v487
      %v625 = vunpack.c.l.b16 %v488
      %v626 = vunpack.c.l.b16 %v489
      %v627 = vunpack.c.l.b16 %v490
      %v628 = vunpack.c.l.b16 %v491
      %v629 = vunpack.c.l.b16 %v492
      %v630 = vunpack.c.l.b16 %v493
      %v631 = vunpack.c.l.b16 %v494
      %v632 = vpack.c.b16 %v617, %v616
      %v633 = vpack.c.b16 %v619, %v618
      %v634 = vpack.c.b16 %v621, %v620
      %v635 = vpack.c.b16 %v623, %v622
      %v636 = vpack.c.b16 %v625, %v624
      %v637 = vpack.c.b16 %v627, %v626
      %v638 = vpack.c.b16 %v629, %v628
      %v639 = vpack.c.b16 %v631, %v630
      %648 = vmatprep.subr.bf16.mxu0 0
      %649 = vmatpush1.bf16.msra.mxu0 %v639
      %650 = vmatprep.subr.bf16.mxu0 0
      %651 = vmatpush1.bf16.msra.mxu0 %v638
      %652 = vmatprep.subr.bf16.mxu0 0
      %653 = vmatpush1.bf16.msra.mxu0 %v637
      %654 = vmatprep.subr.bf16.mxu0 0
      %655 = vmatpush1.bf16.msra.mxu0 %v636
      %656 = vmatprep.subr.bf16.mxu0 0
      %657 = vmatpush1.bf16.msra.mxu0 %v635
      %658 = vmatprep.subr.bf16.mxu0 0
      %659 = vmatpush1.bf16.msra.mxu0 %v634
      %660 = vmatprep.subr.bf16.mxu0 0
      %661 = vmatpush1.bf16.msra.mxu0 %v633
      %662 = vmatprep.subr.bf16.mxu0 0
      %663 = vmatpush1.bf16.msra.mxu0 %v632
      %664 = vmatprep.subr.bf16.mxu0 0
      %665 = vmatpush2.bf16.msra.mxu0 0
      %666 = vmatprep.subr.bf16.mxu0 0
      %667 = vmatpush2.bf16.msra.mxu0 0
      %668 = vmatprep.subr.bf16.mxu0 0
      %669 = vmatpush2.bf16.msra.mxu0 0
      %670 = vmatprep.subr.bf16.mxu0 0
      %671 = vmatpush2.bf16.msra.mxu0 0
      %672 = vmatprep.subr.bf16.mxu0 0
      %673 = vmatpush2.bf16.msra.mxu0 0
      %674 = vmatprep.subr.bf16.mxu0 0
      %675 = vmatpush2.bf16.msra.mxu0 0
      %676 = vmatprep.subr.bf16.mxu0 0
      %677 = vmatpush2.bf16.msra.mxu0 0
      %678 = vmatprep.subr.bf16.mxu0 0
      %679 = vmatpush2.bf16.msra.mxu0 0
      %680 = vmatprep.mubr.bf16.mxu0 0
      %681 = vmatmul.mubr.bf16.gmra.mxu0 %v474
      %v682 = vpop.f32.mrf.mxu0
      %v683 = vadd.f32 %v595, %v682
      %v684 = vpop.f32.mrf.mxu0
      %v685 = vpop.f32.mrf.mxu0
      %v686 = vpop.f32.mrf.mxu0
      %687 = vdwg.mxu0
      %s688 = scalar_lea.vmem %s3, 1
      %v689 = vld [vmem:[%s688] sm:$0x1]
      %v691 = vlaneseq
      %v692 = vshrl.u32 %v691, 7
      %v693 = vsub.s32 0, %v692
      %v694 = vrot.slane %v689, %v693
      %v696 = vadd.f32 %v683, %v694
      %697 = vst [vmem:[#allocation3] sm:$0xf] %v696
      %v698 = vld [vmem:[#allocation3] sm:$0xf]
      %v699 = vpack.c.bf16 %v698, %v698
      %v700 = vld [vmem:[%s4] sm:$0xf]
      %v701 = vld [vmem:[%s4 + $0x4] sm:$0xf]
      %v702 = vld [vmem:[%s4 + $0x8] sm:$0xf]
      %v703 = vld [vmem:[%s4 + $0xc] sm:$0xf]
      %v704 = vld [vmem:[%s4 + $0x10] sm:$0xf]
      %v705 = vld [vmem:[%s4 + $0x14] sm:$0xf]
      %v706 = vld [vmem:[%s4 + $0x18] sm:$0xf]
      %v707 = vld [vmem:[%s4 + $0x1c] sm:$0xf]
      %v708 = vld [vmem:[%s4 + $0x20] sm:$0xf]
      %v709 = vld [vmem:[%s4 + $0x24] sm:$0xf]
      %v710 = vld [vmem:[%s4 + $0x28] sm:$0xf]
      %v711 = vld [vmem:[%s4 + $0x2c] sm:$0xf]
      %v712 = vld [vmem:[%s4 + $0x30] sm:$0xf]
      %v713 = vld [vmem:[%s4 + $0x34] sm:$0xf]
      %v714 = vld [vmem:[%s4 + $0x38] sm:$0xf]
      %v715 = vld [vmem:[%s4 + $0x3c] sm:$0xf]
      %v716 = vld [vmem:[%s5] sm:$0x1]
      %v718 = vlaneseq
      %v719 = vshrl.u32 %v718, 7
      %v720 = vsub.s32 0, %v719
      %v721 = vrot.slane %v716, %v720
      %v739 = vunpack.c.l.b16 %v700
      %v740 = vunpack.c.l.b16 %v701
      %v741 = vunpack.c.l.b16 %v702
      %v742 = vunpack.c.l.b16 %v703
      %v743 = vunpack.c.l.b16 %v704
      %v744 = vunpack.c.l.b16 %v705
      %v745 = vunpack.c.l.b16 %v706
      %v746 = vunpack.c.l.b16 %v707
      %v747 = vunpack.c.l.b16 %v708
      %v748 = vunpack.c.l.b16 %v709
      %v749 = vunpack.c.l.b16 %v710
      %v750 = vunpack.c.l.b16 %v711
      %v751 = vunpack.c.l.b16 %v712
      %v752 = vunpack.c.l.b16 %v713
      %v753 = vunpack.c.l.b16 %v714
      %v754 = vunpack.c.l.b16 %v715
      %v755 = vpack.c.b16 %v740, %v739
      %v756 = vpack.c.b16 %v742, %v741
      %v757 = vpack.c.b16 %v744, %v743
      %v758 = vpack.c.b16 %v746, %v745
      %v759 = vpack.c.b16 %v748, %v747
      %v760 = vpack.c.b16 %v750, %v749
      %v761 = vpack.c.b16 %v752, %v751
      %v762 = vpack.c.b16 %v754, %v753
      %771 = vmatprep.subr.bf16.mxu0 0
      %772 = vmatpush1.bf16.msra.mxu0 %v762
      %773 = vmatprep.subr.bf16.mxu0 0
      %774 = vmatpush1.bf16.msra.mxu0 %v761
      %775 = vmatprep.subr.bf16.mxu0 0
      %776 = vmatpush1.bf16.msra.mxu0 %v760
      %777 = vmatprep.subr.bf16.mxu0 0
      %778 = vmatpush1.bf16.msra.mxu0 %v759
      %779 = vmatprep.subr.bf16.mxu0 0
      %780 = vmatpush1.bf16.msra.mxu0 %v758
      %781 = vmatprep.subr.bf16.mxu0 0
      %782 = vmatpush1.bf16.msra.mxu0 %v757
      %783 = vmatprep.subr.bf16.mxu0 0
      %784 = vmatpush1.bf16.msra.mxu0 %v756
      %785 = vmatprep.subr.bf16.mxu0 0
      %786 = vmatpush1.bf16.msra.mxu0 %v755
      %787 = vmatprep.subr.bf16.mxu0 0
      %788 = vmatpush2.bf16.msra.mxu0 0
      %789 = vmatprep.subr.bf16.mxu0 0
      %790 = vmatpush2.bf16.msra.mxu0 0
      %791 = vmatprep.subr.bf16.mxu0 0
      %792 = vmatpush2.bf16.msra.mxu0 0
      %793 = vmatprep.subr.bf16.mxu0 0
      %794 = vmatpush2.bf16.msra.mxu0 0
      %795 = vmatprep.subr.bf16.mxu0 0
      %796 = vmatpush2.bf16.msra.mxu0 0
      %797 = vmatprep.subr.bf16.mxu0 0
      %798 = vmatpush2.bf16.msra.mxu0 0
      %799 = vmatprep.subr.bf16.mxu0 0
      %800 = vmatpush2.bf16.msra.mxu0 0
      %801 = vmatprep.subr.bf16.mxu0 0
      %802 = vmatpush2.bf16.msra.mxu0 0
      %803 = vmatprep.mubr.bf16.mxu0 0
      %804 = vmatmul.mubr.bf16.gmra.mxu0 %v699
      %v805 = vpop.f32.mrf.mxu0
      %v806 = vadd.f32 %v721, %v805
      %v807 = vpop.f32.mrf.mxu0
      %v808 = vpop.f32.mrf.mxu0
      %v809 = vpop.f32.mrf.mxu0
      %810 = vdwg.mxu0
      %811 = vst [vmem:[%s249] sm:$0xf] %v806
      %p812 = scmp.lt.s32.totalorder %s17, 1
      %s813 = scalar_select %p812, %s17, 1
      %s814 = smul.addr %s813, 4
      %s815 = scalar_lea.vmem %s6, %s814
      // Predicated region
      $region45: #{fwd.4} parent=43 // pred_check
        %p816 = pneg %p166
      $region46: #{fwd.4} parent=43 // pred_check_branch
        %818 = sbr.rel (%p816) target = $region48
      $region47: #{fwd.4} parent=43 // pred_region
        _
      $region48: #{fwd.4} parent=43 // pred_fallthru
        _
    $region44: #{fwd.4} parent=5 // pred_fallthru
      _
    %p819 = scmp.le.s32.totalorder 2, %s12
    // Predicated region
    $region49: #{fwd.4} parent=5 // pred_check
      %p820 = pneg %p819
    $region50: #{fwd.4} parent=5 // pred_check_branch
      %822 = sbr.rel (%p820) target = $region52
    $region51: #{fwd.4} parent=5 // pred_region
      %s823 = ssub.s32 %s12, 2
      // Predicated region
      $region53: #{fwd.4} parent=51 // pred_check
        %p824 = pneg %p172
      $region54: #{fwd.4} parent=51 // pred_check_branch
        %826 = sbr.rel (%p824) target = $region56
      $region55: #{fwd.4} parent=51 // pred_region
        %p827 = scmp.lt.s32.totalorder %s18, 1
        %s828 = scalar_select %p827, %s18, 1
        %s829 = smul.addr %s828, 4
        %s830 = scalar_lea.vmem %s6, %s829
      $region56: #{fwd.4} parent=51 // pred_fallthru
        _
    $region52: #{fwd.4} parent=5 // pred_fallthru
      _
  $region6: #{fwd.4} parent=0 // loop_footer
    %s16 = sadd.s32 1, %s12
  $region7: #{fwd.4} parent=0 // loop_footer_branch
    %11 = sbr.rel target = $region3
  $region8: #{fwd.4} parent=0 // loop_exit
    _

// kernel: fwd.3
$region0: #{fwd.3}
  #allocation0 [shape = 'u32[]', space=smem, size = 0x4, offset = 0x4, fixed_abs, tag = 'smem constant byte address 0x4 - core index']
  #allocation1 [shape = 'u32[144,128]{1,0:T(1,128)}', space=vmem, size = 0x12000, scoped, tag = 'internal scratch']
  #allocation2 [shape = 'f32[32,128]{1,0:T(8,128)}', space=vmem, size = 0x4000, scoped, tag = 'scratch operand']
  #allocation3 [shape = 'f32[32,128]{1,0:T(8,128)}', space=vmem, size = 0x4000, scoped, tag = 'scratch operand']
  %s0 = inlined_call_operand.vmem [shape: f32[1,64,128], index: 0, kind: input, shape index: {}]
  %s1 = inlined_call_operand.vmem [shape: bf16[3,128,128], index: 1, kind: input, shape index: {}]
  %s2 = inlined_call_operand.vmem [shape: bf16[3,128,128], index: 2, kind: input, shape index: {}]
  %s3 = inlined_call_operand.vmem [shape: f32[3,1,128], index: 3, kind: input, shape index: {}]
  %s4 = inlined_call_operand.vmem [shape: bf16[128,128], index: 4, kind: input, shape index: {}]
  %s5 = inlined_call_operand.vmem [shape: f32[1,128], index: 5, kind: input, shape index: {}]
  %s6 = inlined_call_operand.vmem [shape: f32[1,8,128], index: 6, kind: output, shape index: {}]
  %s7 = sld [smem:[#allocation0]]
  $region34: #{fwd.3} parent=0
    _
  %s9 = ssub.s32 1, %s7
  %s10 = scalar_select 0, %s9, %s7
  // Predicated region
  $region2: #{fwd.3} parent=0 // pred_check
    _
  $region3: #{fwd.3} parent=0 // pred_check_branch
    %12 = sbr.rel (0) target = $region5
  $region4: #{fwd.3} parent=0 // pred_region
    _
  $region5: #{fwd.3} parent=0 // pred_fallthru
    _
  // Predicated region
  $region6: #{fwd.3} parent=0 // pred_check
    _
  $region7: #{fwd.3} parent=0 // pred_check_branch
    %14 = sbr.rel (0) target = $region9
  $region8: #{fwd.3} parent=0 // pred_region
    _
  $region9: #{fwd.3} parent=0 // pred_fallthru
    _
  // Predicated region
  $region10: #{fwd.3} parent=0 // pred_check
    _
  $region11: #{fwd.3} parent=0 // pred_check_branch
    %16 = sbr.rel (0) target = $region13
  $region12: #{fwd.3} parent=0 // pred_region
    _
  $region13: #{fwd.3} parent=0 // pred_fallthru
    _
  // Predicated region
  $region14: #{fwd.3} parent=0 // pred_check
    _
  $region15: #{fwd.3} parent=0 // pred_check_branch
    %18 = sbr.rel (0) target = $region17
  $region16: #{fwd.3} parent=0 // pred_region
    _
  $region17: #{fwd.3} parent=0 // pred_fallthru
    _
  // Predicated region
  $region18: #{fwd.3} parent=0 // pred_check
    _
  $region19: #{fwd.3} parent=0 // pred_check_branch
    %20 = sbr.rel (0) target = $region21
  $region20: #{fwd.3} parent=0 // pred_region
    _
  $region21: #{fwd.3} parent=0 // pred_fallthru
    _
  // Predicated region
  $region22: #{fwd.3} parent=0 // pred_check
    _
  $region23: #{fwd.3} parent=0 // pred_check_branch
    %22 = sbr.rel (0) target = $region25
  $region24: #{fwd.3} parent=0 // pred_region
    _
  $region25: #{fwd.3} parent=0 // pred_fallthru
    _
  %v24 = vld [vmem:[%s0] ss:$2 sm:$0xff]
  %s25 = scalar_lea.vmem %s0, 16
  %v26 = vld [vmem:[%s25] ss:$2 sm:$0xff]
  %s27 = scalar_lea.vmem %s0, 32
  %v28 = vld [vmem:[%s27] ss:$2 sm:$0xff]
  %s29 = scalar_lea.vmem %s0, 48
  %v30 = vld [vmem:[%s29] ss:$2 sm:$0xff]
  %v31 = vpack.c.bf16 %v26, %v24
  %v32 = vpack.c.bf16 %v30, %v28
  %s33 = scalar_lea.vmem %s0, 1
  %v34 = vld [vmem:[%s33] ss:$2 sm:$0xff]
  %s35 = scalar_lea.vmem %s0, 17
  %v36 = vld [vmem:[%s35] ss:$2 sm:$0xff]
  %s37 = scalar_lea.vmem %s0, 33
  %v38 = vld [vmem:[%s37] ss:$2 sm:$0xff]
  %s39 = scalar_lea.vmem %s0, 49
  %v40 = vld [vmem:[%s39] ss:$2 sm:$0xff]
  %v41 = vpack.c.bf16 %v36, %v34
  %v42 = vpack.c.bf16 %v40, %v38
  %v43 = vld [vmem:[%s1] sm:$0xf]
  %v44 = vld [vmem:[%s1 + $0x4] sm:$0xf]
  %v45 = vld [vmem:[%s1 + $0x8] sm:$0xf]
  %v46 = vld [vmem:[%s1 + $0xc] sm:$0xf]
  %v47 = vld [vmem:[%s1 + $0x10] sm:$0xf]
  %v48 = vld [vmem:[%s1 + $0x14] sm:$0xf]
  %v49 = vld [vmem:[%s1 + $0x18] sm:$0xf]
  %v50 = vld [vmem:[%s1 + $0x1c] sm:$0xf]
  %v51 = vld [vmem:[%s1 + $0x20] sm:$0xf]
  %v52 = vld [vmem:[%s1 + $0x24] sm:$0xf]
  %v53 = vld [vmem:[%s1 + $0x28] sm:$0xf]
  %v54 = vld [vmem:[%s1 + $0x2c] sm:$0xf]
  %v55 = vld [vmem:[%s1 + $0x30] sm:$0xf]
  %v56 = vld [vmem:[%s1 + $0x34] sm:$0xf]
  %v57 = vld [vmem:[%s1 + $0x38] sm:$0xf]
  %v58 = vld [vmem:[%s1 + $0x3c] sm:$0xf]
  %v59 = vld [vmem:[%s2] sm:$0xf]
  %v60 = vld [vmem:[%s2 + $0x4] sm:$0xf]
  %v61 = vld [vmem:[%s2 + $0x8] sm:$0xf]
  %v62 = vld [vmem:[%s2 + $0xc] sm:$0xf]
  %v63 = vld [vmem:[%s2 + $0x10] sm:$0xf]
  %v64 = vld [vmem:[%s2 + $0x14] sm:$0xf]
  %v65 = vld [vmem:[%s2 + $0x18] sm:$0xf]
  %v66 = vld [vmem:[%s2 + $0x1c] sm:$0xf]
  %v67 = vld [vmem:[%s2 + $0x20] sm:$0xf]
  %v68 = vld [vmem:[%s2 + $0x24] sm:$0xf]
  %v69 = vld [vmem:[%s2 + $0x28] sm:$0xf]
  %v70 = vld [vmem:[%s2 + $0x2c] sm:$0xf]
  %v71 = vld [vmem:[%s2 + $0x30] sm:$0xf]
  %v72 = vld [vmem:[%s2 + $0x34] sm:$0xf]
  %v73 = vld [vmem:[%s2 + $0x38] sm:$0xf]
  %v74 = vld [vmem:[%s2 + $0x3c] sm:$0xf]
  %v91 = vunpack.c.l.b16 %v59
  %v92 = vunpack.c.l.b16 %v60
  %v93 = vunpack.c.l.b16 %v61
  %v94 = vunpack.c.l.b16 %v62
  %v95 = vunpack.c.l.b16 %v63
  %v96 = vunpack.c.l.b16 %v64
  %v97 = vunpack.c.l.b16 %v65
  %v98 = vunpack.c.l.b16 %v66
  %v99 = vunpack.c.l.b16 %v67
  %v100 = vunpack.c.l.b16 %v68
  %v101 = vunpack.c.l.b16 %v69
  %v102 = vunpack.c.l.b16 %v70
  %v103 = vunpack.c.l.b16 %v71
  %v104 = vunpack.c.l.b16 %v72
  %v105 = vunpack.c.l.b16 %v73
  %v106 = vunpack.c.l.b16 %v74
  %v107 = vpack.c.b16 %v92, %v91
  %v108 = vpack.c.b16 %v94, %v93
  %v109 = vpack.c.b16 %v96, %v95
  %v110 = vpack.c.b16 %v98, %v97
  %v111 = vpack.c.b16 %v100, %v99
  %v112 = vpack.c.b16 %v102, %v101
  %v113 = vpack.c.b16 %v104, %v103
  %v114 = vpack.c.b16 %v106, %v105
  %123 = vmatprep.subr.bf16.mxu0 0
  %124 = vmatpush1.bf16.msra.mxu0 %v114
  %125 = vmatprep.subr.bf16.mxu0 0
  %126 = vmatpush1.bf16.msra.mxu0 %v113
  %127 = vmatprep.subr.bf16.mxu0 0
  %128 = vmatpush1.bf16.msra.mxu0 %v112
  %129 = vmatprep.subr.bf16.mxu0 0
  %130 = vmatpush1.bf16.msra.mxu0 %v111
  %131 = vmatprep.subr.bf16.mxu0 0
  %132 = vmatpush1.bf16.msra.mxu0 %v110
  %133 = vmatprep.subr.bf16.mxu0 0
  %134 = vmatpush1.bf16.msra.mxu0 %v109
  %135 = vmatprep.subr.bf16.mxu0 0
  %136 = vmatpush1.bf16.msra.mxu0 %v108
  %137 = vmatprep.subr.bf16.mxu0 0
  %138 = vmatpush1.bf16.msra.mxu0 %v107
  %139 = vmatprep.subr.bf16.mxu0 0
  %140 = vmatpush2.bf16.msra.mxu0 0
  %141 = vmatprep.subr.bf16.mxu0 0
  %142 = vmatpush2.bf16.msra.mxu0 0
  %143 = vmatprep.subr.bf16.mxu0 0
  %144 = vmatpush2.bf16.msra.mxu0 0
  %145 = vmatprep.subr.bf16.mxu0 0
  %146 = vmatpush2.bf16.msra.mxu0 0
  %147 = vmatprep.subr.bf16.mxu0 0
  %148 = vmatpush2.bf16.msra.mxu0 0
  %149 = vmatprep.subr.bf16.mxu0 0
  %150 = vmatpush2.bf16.msra.mxu0 0
  %151 = vmatprep.subr.bf16.mxu0 0
  %152 = vmatpush2.bf16.msra.mxu0 0
  %153 = vmatprep.subr.bf16.mxu0 0
  %154 = vmatpush2.bf16.msra.mxu0 0
  %155 = vmatprep.mubr.bf16.mxu0 0
  %156 = vmatmul.mubr.bf16.gmra.mxu0 %v41
  %v157 = vpop.f32.mrf.mxu0
  %v158 = vadd.f32 0.0, %v157
  %v159 = vpop.f32.mrf.mxu0
  %v160 = vpop.f32.mrf.mxu0
  %v161 = vadd.f32 0.0, %v160
  %v162 = vpop.f32.mrf.mxu0
  %163 = vmatprep.mubr.bf16.mxu0 0
  %164 = vmatmul.mubr.bf16.gmra.mxu0 %v42
  %v165 = vpop.f32.mrf.mxu0
  %v166 = vadd.f32 0.0, %v165
  %v167 = vpop.f32.mrf.mxu0
  %v168 = vpop.f32.mrf.mxu0
  %v169 = vadd.f32 0.0, %v168
  %v170 = vpop.f32.mrf.mxu0
  %171 = vdwg.mxu0
  %v188 = vunpack.c.l.b16 %v43
  %v189 = vunpack.c.l.b16 %v44
  %v190 = vunpack.c.l.b16 %v45
  %v191 = vunpack.c.l.b16 %v46
  %v192 = vunpack.c.l.b16 %v47
  %v193 = vunpack.c.l.b16 %v48
  %v194 = vunpack.c.l.b16 %v49
  %v195 = vunpack.c.l.b16 %v50
  %v196 = vunpack.c.l.b16 %v51
  %v197 = vunpack.c.l.b16 %v52
  %v198 = vunpack.c.l.b16 %v53
  %v199 = vunpack.c.l.b16 %v54
  %v200 = vunpack.c.l.b16 %v55
  %v201 = vunpack.c.l.b16 %v56
  %v202 = vunpack.c.l.b16 %v57
  %v203 = vunpack.c.l.b16 %v58
  %v204 = vpack.c.b16 %v189, %v188
  %v205 = vpack.c.b16 %v191, %v190
  %v206 = vpack.c.b16 %v193, %v192
  %v207 = vpack.c.b16 %v195, %v194
  %v208 = vpack.c.b16 %v197, %v196
  %v209 = vpack.c.b16 %v199, %v198
  %v210 = vpack.c.b16 %v201, %v200
  %v211 = vpack.c.b16 %v203, %v202
  %220 = vmatprep.subr.bf16.mxu0 0
  %221 = vmatpush1.bf16.msra.mxu0 %v211
  %222 = vmatprep.subr.bf16.mxu0 0
  %223 = vmatpush1.bf16.msra.mxu0 %v210
  %224 = vmatprep.subr.bf16.mxu0 0
  %225 = vmatpush1.bf16.msra.mxu0 %v209
  %226 = vmatprep.subr.bf16.mxu0 0
  %227 = vmatpush1.bf16.msra.mxu0 %v208
  %228 = vmatprep.subr.bf16.mxu0 0
  %229 = vmatpush1.bf16.msra.mxu0 %v207
  %230 = vmatprep.subr.bf16.mxu0 0
  %231 = vmatpush1.bf16.msra.mxu0 %v206
  %232 = vmatprep.subr.bf16.mxu0 0
  %233 = vmatpush1.bf16.msra.mxu0 %v205
  %234 = vmatprep.subr.bf16.mxu0 0
  %235 = vmatpush1.bf16.msra.mxu0 %v204
  %236 = vmatprep.subr.bf16.mxu0 0
  %237 = vmatpush2.bf16.msra.mxu0 0
  %238 = vmatprep.subr.bf16.mxu0 0
  %239 = vmatpush2.bf16.msra.mxu0 0
  %240 = vmatprep.subr.bf16.mxu0 0
  %241 = vmatpush2.bf16.msra.mxu0 0
  %242 = vmatprep.subr.bf16.mxu0 0
  %243 = vmatpush2.bf16.msra.mxu0 0
  %244 = vmatprep.subr.bf16.mxu0 0
  %245 = vmatpush2.bf16.msra.mxu0 0
  %246 = vmatprep.subr.bf16.mxu0 0
  %247 = vmatpush2.bf16.msra.mxu0 0
  %248 = vmatprep.subr.bf16.mxu0 0
  %249 = vmatpush2.bf16.msra.mxu0 0
  %250 = vmatprep.subr.bf16.mxu0 0
  %251 = vmatpush2.bf16.msra.mxu0 0
  %252 = vmatprep.mubr.bf16.mxu0 0
  %253 = vmatmul.mubr.bf16.gmra.mxu0 %v31
  %v254 = vpop.f32.mrf.mxu0
  %v255 = vadd.f32 %v158, %v254
  %v256 = vpop.f32.mrf.mxu0
  %v257 = vpop.f32.mrf.mxu0
  %v258 = vadd.f32 %v161, %v257
  %v259 = vpop.f32.mrf.mxu0
  %260 = vmatprep.mubr.bf16.mxu0 0
  %261 = vmatmul.mubr.bf16.gmra.mxu0 %v32
  %v262 = vpop.f32.mrf.mxu0
  %v263 = vadd.f32 %v166, %v262
  %v264 = vpop.f32.mrf.mxu0
  %v265 = vpop.f32.mrf.mxu0
  %v266 = vadd.f32 %v169, %v265
  %v267 = vpop.f32.mrf.mxu0
  %268 = vdwg.mxu0
  %v269 = vld [vmem:[%s3] sm:$0x1]
  %v271 = vlaneseq
  %v272 = vshrl.u32 %v271, 7
  %v273 = vsub.s32 0, %v272
  %v274 = vrot.slane %v269, %v273
  %v276 = vadd.f32 %v255, %v274
  %v277 = vadd.f32 %v258, %v274
  %v278 = vadd.f32 %v263, %v274
  %v279 = vadd.f32 %v266, %v274
  %280 = vst [vmem:[#allocation2] sm:$0xff] %v276
  %281 = vst [vmem:[#allocation2 + $0x8] sm:$0xff] %v277
  %282 = vst [vmem:[#allocation2 + $0x10] sm:$0xff] %v278
  %283 = vst [vmem:[#allocation2 + $0x18] sm:$0xff] %v279
  %v284 = vld [vmem:[#allocation2] ss:$2 sm:$0xff]
  %s285 = scalar_lea.vmem [#allocation2], 16
  %v286 = vld [vmem:[%s285] ss:$2 sm:$0xff]
  %v287 = vpack.c.bf16 %v286, %v284
  %s288 = scalar_lea.vmem [#allocation2], 1
  %v289 = vld [vmem:[%s288] ss:$2 sm:$0xff]
  %s290 = scalar_lea.vmem [#allocation2], 17
  %v291 = vld [vmem:[%s290] ss:$2 sm:$0xff]
  %v292 = vpack.c.bf16 %v291, %v289
  %s293 = scalar_lea.vmem %s1, 64
  %v294 = vld [vmem:[%s293] sm:$0xf]
  %v295 = vld [vmem:[%s293 + $0x4] sm:$0xf]
  %v296 = vld [vmem:[%s293 + $0x8] sm:$0xf]
  %v297 = vld [vmem:[%s293 + $0xc] sm:$0xf]
  %v298 = vld [vmem:[%s293 + $0x10] sm:$0xf]
  %v299 = vld [vmem:[%s293 + $0x14] sm:$0xf]
  %v300 = vld [vmem:[%s293 + $0x18] sm:$0xf]
  %v301 = vld [vmem:[%s293 + $0x1c] sm:$0xf]
  %v302 = vld [vmem:[%s293 + $0x20] sm:$0xf]
  %v303 = vld [vmem:[%s293 + $0x24] sm:$0xf]
  %v304 = vld [vmem:[%s293 + $0x28] sm:$0xf]
  %v305 = vld [vmem:[%s293 + $0x2c] sm:$0xf]
  %v306 = vld [vmem:[%s293 + $0x30] sm:$0xf]
  %v307 = vld [vmem:[%s293 + $0x34] sm:$0xf]
  %v308 = vld [vmem:[%s293 + $0x38] sm:$0xf]
  %v309 = vld [vmem:[%s293 + $0x3c] sm:$0xf]
  %s310 = scalar_lea.vmem %s2, 64
  %v311 = vld [vmem:[%s310] sm:$0xf]
  %v312 = vld [vmem:[%s310 + $0x4] sm:$0xf]
  %v313 = vld [vmem:[%s310 + $0x8] sm:$0xf]
  %v314 = vld [vmem:[%s310 + $0xc] sm:$0xf]
  %v315 = vld [vmem:[%s310 + $0x10] sm:$0xf]
  %v316 = vld [vmem:[%s310 + $0x14] sm:$0xf]
  %v317 = vld [vmem:[%s310 + $0x18] sm:$0xf]
  %v318 = vld [vmem:[%s310 + $0x1c] sm:$0xf]
  %v319 = vld [vmem:[%s310 + $0x20] sm:$0xf]
  %v320 = vld [vmem:[%s310 + $0x24] sm:$0xf]
  %v321 = vld [vmem:[%s310 + $0x28] sm:$0xf]
  %v322 = vld [vmem:[%s310 + $0x2c] sm:$0xf]
  %v323 = vld [vmem:[%s310 + $0x30] sm:$0xf]
  %v324 = vld [vmem:[%s310 + $0x34] sm:$0xf]
  %v325 = vld [vmem:[%s310 + $0x38] sm:$0xf]
  %v326 = vld [vmem:[%s310 + $0x3c] sm:$0xf]
  %v343 = vunpack.c.l.b16 %v311
  %v344 = vunpack.c.l.b16 %v312
  %v345 = vunpack.c.l.b16 %v313
  %v346 = vunpack.c.l.b16 %v314
  %v347 = vunpack.c.l.b16 %v315
  %v348 = vunpack.c.l.b16 %v316
  %v349 = vunpack.c.l.b16 %v317
  %v350 = vunpack.c.l.b16 %v318
  %v351 = vunpack.c.l.b16 %v319
  %v352 = vunpack.c.l.b16 %v320
  %v353 = vunpack.c.l.b16 %v321
  %v354 = vunpack.c.l.b16 %v322
  %v355 = vunpack.c.l.b16 %v323
  %v356 = vunpack.c.l.b16 %v324
  %v357 = vunpack.c.l.b16 %v325
  %v358 = vunpack.c.l.b16 %v326
  %v359 = vpack.c.b16 %v344, %v343
  %v360 = vpack.c.b16 %v346, %v345
  %v361 = vpack.c.b16 %v348, %v347
  %v362 = vpack.c.b16 %v350, %v349
  %v363 = vpack.c.b16 %v352, %v351
  %v364 = vpack.c.b16 %v354, %v353
  %v365 = vpack.c.b16 %v356, %v355
  %v366 = vpack.c.b16 %v358, %v357
  %375 = vmatprep.subr.bf16.mxu0 0
  %376 = vmatpush1.bf16.msra.mxu0 %v366
  %377 = vmatprep.subr.bf16.mxu0 0
  %378 = vmatpush1.bf16.msra.mxu0 %v365
  %379 = vmatprep.subr.bf16.mxu0 0
  %380 = vmatpush1.bf16.msra.mxu0 %v364
  %381 = vmatprep.subr.bf16.mxu0 0
  %382 = vmatpush1.bf16.msra.mxu0 %v363
  %383 = vmatprep.subr.bf16.mxu0 0
  %384 = vmatpush1.bf16.msra.mxu0 %v362
  %385 = vmatprep.subr.bf16.mxu0 0
  %386 = vmatpush1.bf16.msra.mxu0 %v361
  %387 = vmatprep.subr.bf16.mxu0 0
  %388 = vmatpush1.bf16.msra.mxu0 %v360
  %389 = vmatprep.subr.bf16.mxu0 0
  %390 = vmatpush1.bf16.msra.mxu0 %v359
  %391 = vmatprep.subr.bf16.mxu0 0
  %392 = vmatpush2.bf16.msra.mxu0 0
  %393 = vmatprep.subr.bf16.mxu0 0
  %394 = vmatpush2.bf16.msra.mxu0 0
  %395 = vmatprep.subr.bf16.mxu0 0
  %396 = vmatpush2.bf16.msra.mxu0 0
  %397 = vmatprep.subr.bf16.mxu0 0
  %398 = vmatpush2.bf16.msra.mxu0 0
  %399 = vmatprep.subr.bf16.mxu0 0
  %400 = vmatpush2.bf16.msra.mxu0 0
  %401 = vmatprep.subr.bf16.mxu0 0
  %402 = vmatpush2.bf16.msra.mxu0 0
  %403 = vmatprep.subr.bf16.mxu0 0
  %404 = vmatpush2.bf16.msra.mxu0 0
  %405 = vmatprep.subr.bf16.mxu0 0
  %406 = vmatpush2.bf16.msra.mxu0 0
  %407 = vmatprep.mubr.bf16.mxu0 0
  %408 = vmatmul.mubr.bf16.gmra.mxu0 %v292
  %v409 = vpop.f32.mrf.mxu0
  %v410 = vadd.f32 0.0, %v409
  %v411 = vpop.f32.mrf.mxu0
  %v412 = vpop.f32.mrf.mxu0
  %v413 = vadd.f32 0.0, %v412
  %v414 = vpop.f32.mrf.mxu0
  %415 = vdwg.mxu0
  %v432 = vunpack.c.l.b16 %v294
  %v433 = vunpack.c.l.b16 %v295
  %v434 = vunpack.c.l.b16 %v296
  %v435 = vunpack.c.l.b16 %v297
  %v436 = vunpack.c.l.b16 %v298
  %v437 = vunpack.c.l.b16 %v299
  %v438 = vunpack.c.l.b16 %v300
  %v439 = vunpack.c.l.b16 %v301
  %v440 = vunpack.c.l.b16 %v302
  %v441 = vunpack.c.l.b16 %v303
  %v442 = vunpack.c.l.b16 %v304
  %v443 = vunpack.c.l.b16 %v305
  %v444 = vunpack.c.l.b16 %v306
  %v445 = vunpack.c.l.b16 %v307
  %v446 = vunpack.c.l.b16 %v308
  %v447 = vunpack.c.l.b16 %v309
  %v448 = vpack.c.b16 %v433, %v432
  %v449 = vpack.c.b16 %v435, %v434
  %v450 = vpack.c.b16 %v437, %v436
  %v451 = vpack.c.b16 %v439, %v438
  %v452 = vpack.c.b16 %v441, %v440
  %v453 = vpack.c.b16 %v443, %v442
  %v454 = vpack.c.b16 %v445, %v444
  %v455 = vpack.c.b16 %v447, %v446
  %464 = vmatprep.subr.bf16.mxu0 0
  %465 = vmatpush1.bf16.msra.mxu0 %v455
  %466 = vmatprep.subr.bf16.mxu0 0
  %467 = vmatpush1.bf16.msra.mxu0 %v454
  %468 = vmatprep.subr.bf16.mxu0 0
  %469 = vmatpush1.bf16.msra.mxu0 %v453
  %470 = vmatprep.subr.bf16.mxu0 0
  %471 = vmatpush1.bf16.msra.mxu0 %v452
  %472 = vmatprep.subr.bf16.mxu0 0
  %473 = vmatpush1.bf16.msra.mxu0 %v451
  %474 = vmatprep.subr.bf16.mxu0 0
  %475 = vmatpush1.bf16.msra.mxu0 %v450
  %476 = vmatprep.subr.bf16.mxu0 0
  %477 = vmatpush1.bf16.msra.mxu0 %v449
  %478 = vmatprep.subr.bf16.mxu0 0
  %479 = vmatpush1.bf16.msra.mxu0 %v448
  %480 = vmatprep.subr.bf16.mxu0 0
  %481 = vmatpush2.bf16.msra.mxu0 0
  %482 = vmatprep.subr.bf16.mxu0 0
  %483 = vmatpush2.bf16.msra.mxu0 0
  %484 = vmatprep.subr.bf16.mxu0 0
  %485 = vmatpush2.bf16.msra.mxu0 0
  %486 = vmatprep.subr.bf16.mxu0 0
  %487 = vmatpush2.bf16.msra.mxu0 0
  %488 = vmatprep.subr.bf16.mxu0 0
  %489 = vmatpush2.bf16.msra.mxu0 0
  %490 = vmatprep.subr.bf16.mxu0 0
  %491 = vmatpush2.bf16.msra.mxu0 0
  %492 = vmatprep.subr.bf16.mxu0 0
  %493 = vmatpush2.bf16.msra.mxu0 0
  %494 = vmatprep.subr.bf16.mxu0 0
  %495 = vmatpush2.bf16.msra.mxu0 0
  %496 = vmatprep.mubr.bf16.mxu0 0
  %497 = vmatmul.mubr.bf16.gmra.mxu0 %v287
  %v498 = vpop.f32.mrf.mxu0
  %v499 = vadd.f32 %v410, %v498
  %v500 = vpop.f32.mrf.mxu0
  %v501 = vpop.f32.mrf.mxu0
  %v502 = vadd.f32 %v413, %v501
  %v503 = vpop.f32.mrf.mxu0
  %504 = vdwg.mxu0
  %s505 = scalar_lea.vmem %s3, 1
  %v506 = vld [vmem:[%s505] sm:$0x1]
  %v508 = vlaneseq
  %v509 = vshrl.u32 %v508, 7
  %v510 = vsub.s32 0, %v509
  %v511 = vrot.slane %v506, %v510
  %v513 = vadd.f32 %v499, %v511
  %v514 = vadd.f32 %v502, %v511
  %515 = vst [vmem:[#allocation3] sm:$0xff] %v513
  %516 = vst [vmem:[#allocation3 + $0x8] sm:$0xff] %v514
  %v517 = vld [vmem:[#allocation3] ss:$2 sm:$0xff]
  %v518 = vpack.c.bf16 %v517, %v517
  %s519 = scalar_lea.vmem [#allocation3], 1
  %v520 = vld [vmem:[%s519] ss:$2 sm:$0xff]
  %v521 = vpack.c.bf16 %v520, %v520
  %s522 = scalar_lea.vmem %s1, 128
  %v523 = vld [vmem:[%s522] sm:$0xf]
  %v524 = vld [vmem:[%s522 + $0x4] sm:$0xf]
  %v525 = vld [vmem:[%s522 + $0x8] sm:$0xf]
  %v526 = vld [vmem:[%s522 + $0xc] sm:$0xf]
  %v527 = vld [vmem:[%s522 + $0x10] sm:$0xf]
  %v528 = vld [vmem:[%s522 + $0x14] sm:$0xf]
  %v529 = vld [vmem:[%s522 + $0x18] sm:$0xf]
  %v530 = vld [vmem:[%s522 + $0x1c] sm:$0xf]
  %v531 = vld [vmem:[%s522 + $0x20] sm:$0xf]
  %v532 = vld [vmem:[%s522 + $0x24] sm:$0xf]
  %v533 = vld [vmem:[%s522 + $0x28] sm:$0xf]
  %v534 = vld [vmem:[%s522 + $0x2c] sm:$0xf]
  %v535 = vld [vmem:[%s522 + $0x30] sm:$0xf]
  %v536 = vld [vmem:[%s522 + $0x34] sm:$0xf]
  %v537 = vld [vmem:[%s522 + $0x38] sm:$0xf]
  %v538 = vld [vmem:[%s522 + $0x3c] sm:$0xf]
  %s539 = scalar_lea.vmem %s2, 128
  %v540 = vld [vmem:[%s539] sm:$0xf]
  %v541 = vld [vmem:[%s539 + $0x4] sm:$0xf]
  %v542 = vld [vmem:[%s539 + $0x8] sm:$0xf]
  %v543 = vld [vmem:[%s539 + $0xc] sm:$0xf]
  %v544 = vld [vmem:[%s539 + $0x10] sm:$0xf]
  %v545 = vld [vmem:[%s539 + $0x14] sm:$0xf]
  %v546 = vld [vmem:[%s539 + $0x18] sm:$0xf]
  %v547 = vld [vmem:[%s539 + $0x1c] sm:$0xf]
  %v548 = vld [vmem:[%s539 + $0x20] sm:$0xf]
  %v549 = vld [vmem:[%s539 + $0x24] sm:$0xf]
  %v550 = vld [vmem:[%s539 + $0x28] sm:$0xf]
  %v551 = vld [vmem:[%s539 + $0x2c] sm:$0xf]
  %v552 = vld [vmem:[%s539 + $0x30] sm:$0xf]
  %v553 = vld [vmem:[%s539 + $0x34] sm:$0xf]
  %v554 = vld [vmem:[%s539 + $0x38] sm:$0xf]
  %v555 = vld [vmem:[%s539 + $0x3c] sm:$0xf]
  %v572 = vunpack.c.l.b16 %v540
  %v573 = vunpack.c.l.b16 %v541
  %v574 = vunpack.c.l.b16 %v542
  %v575 = vunpack.c.l.b16 %v543
  %v576 = vunpack.c.l.b16 %v544
  %v577 = vunpack.c.l.b16 %v545
  %v578 = vunpack.c.l.b16 %v546
  %v579 = vunpack.c.l.b16 %v547
  %v580 = vunpack.c.l.b16 %v548
  %v581 = vunpack.c.l.b16 %v549
  %v582 = vunpack.c.l.b16 %v550
  %v583 = vunpack.c.l.b16 %v551
  %v584 = vunpack.c.l.b16 %v552
  %v585 = vunpack.c.l.b16 %v553
  %v586 = vunpack.c.l.b16 %v554
  %v587 = vunpack.c.l.b16 %v555
  %v588 = vpack.c.b16 %v573, %v572
  %v589 = vpack.c.b16 %v575, %v574
  %v590 = vpack.c.b16 %v577, %v576
  %v591 = vpack.c.b16 %v579, %v578
  %v592 = vpack.c.b16 %v581, %v580
  %v593 = vpack.c.b16 %v583, %v582
  %v594 = vpack.c.b16 %v585, %v584
  %v595 = vpack.c.b16 %v587, %v586
  %604 = vmatprep.subr.bf16.mxu0 0
  %605 = vmatpush1.bf16.msra.mxu0 %v595
  %606 = vmatprep.subr.bf16.mxu0 0
  %607 = vmatpush1.bf16.msra.mxu0 %v594
  %608 = vmatprep.subr.bf16.mxu0 0
  %609 = vmatpush1.bf16.msra.mxu0 %v593
  %610 = vmatprep.subr.bf16.mxu0 0
  %611 = vmatpush1.bf16.msra.mxu0 %v592
  %612 = vmatprep.subr.bf16.mxu0 0
  %613 = vmatpush1.bf16.msra.mxu0 %v591
  %614 = vmatprep.subr.bf16.mxu0 0
  %615 = vmatpush1.bf16.msra.mxu0 %v590
  %616 = vmatprep.subr.bf16.mxu0 0
  %617 = vmatpush1.bf16.msra.mxu0 %v589
  %618 = vmatprep.subr.bf16.mxu0 0
  %619 = vmatpush1.bf16.msra.mxu0 %v588
  %620 = vmatprep.subr.bf16.mxu0 0
  %621 = vmatpush2.bf16.msra.mxu0 0
  %622 = vmatprep.subr.bf16.mxu0 0
  %623 = vmatpush2.bf16.msra.mxu0 0
  %624 = vmatprep.subr.bf16.mxu0 0
  %625 = vmatpush2.bf16.msra.mxu0 0
  %626 = vmatprep.subr.bf16.mxu0 0
  %627 = vmatpush2.bf16.msra.mxu0 0
  %628 = vmatprep.subr.bf16.mxu0 0
  %629 = vmatpush2.bf16.msra.mxu0 0
  %630 = vmatprep.subr.bf16.mxu0 0
  %631 = vmatpush2.bf16.msra.mxu0 0
  %632 = vmatprep.subr.bf16.mxu0 0
  %633 = vmatpush2.bf16.msra.mxu0 0
  %634 = vmatprep.subr.bf16.mxu0 0
  %635 = vmatpush2.bf16.msra.mxu0 0
  %636 = vmatprep.mubr.bf16.mxu0 0
  %637 = vmatmul.mubr.bf16.gmra.mxu0 %v521
  %v638 = vpop.f32.mrf.mxu0
  %v639 = vadd.f32 0.0, %v638
  %v640 = vpop.f32.mrf.mxu0
  %v641 = vpop.f32.mrf.mxu0
  %v642 = vpop.f32.mrf.mxu0
  %643 = vdwg.mxu0
  %v660 = vunpack.c.l.b16 %v523
  %v661 = vunpack.c.l.b16 %v524
  %v662 = vunpack.c.l.b16 %v525
  %v663 = vunpack.c.l.b16 %v526
  %v664 = vunpack.c.l.b16 %v527
  %v665 = vunpack.c.l.b16 %v528
  %v666 = vunpack.c.l.b16 %v529
  %v667 = vunpack.c.l.b16 %v530
  %v668 = vunpack.c.l.b16 %v531
  %v669 = vunpack.c.l.b16 %v532
  %v670 = vunpack.c.l.b16 %v533
  %v671 = vunpack.c.l.b16 %v534
  %v672 = vunpack.c.l.b16 %v535
  %v673 = vunpack.c.l.b16 %v536
  %v674 = vunpack.c.l.b16 %v537
  %v675 = vunpack.c.l.b16 %v538
  %v676 = vpack.c.b16 %v661, %v660
  %v677 = vpack.c.b16 %v663, %v662
  %v678 = vpack.c.b16 %v665, %v664
  %v679 = vpack.c.b16 %v667, %v666
  %v680 = vpack.c.b16 %v669, %v668
  %v681 = vpack.c.b16 %v671, %v670
  %v682 = vpack.c.b16 %v673, %v672
  %v683 = vpack.c.b16 %v675, %v674
  %692 = vmatprep.subr.bf16.mxu0 0
  %693 = vmatpush1.bf16.msra.mxu0 %v683
  %694 = vmatprep.subr.bf16.mxu0 0
  %695 = vmatpush1.bf16.msra.mxu0 %v682
  %696 = vmatprep.subr.bf16.mxu0 0
  %697 = vmatpush1.bf16.msra.mxu0 %v681
  %698 = vmatprep.subr.bf16.mxu0 0
  %699 = vmatpush1.bf16.msra.mxu0 %v680
  %700 = vmatprep.subr.bf16.mxu0 0
  %701 = vmatpush1.bf16.msra.mxu0 %v679
  %702 = vmatprep.subr.bf16.mxu0 0
  %703 = vmatpush1.bf16.msra.mxu0 %v678
  %704 = vmatprep.subr.bf16.mxu0 0
  %705 = vmatpush1.bf16.msra.mxu0 %v677
  %706 = vmatprep.subr.bf16.mxu0 0
  %707 = vmatpush1.bf16.msra.mxu0 %v676
  %708 = vmatprep.subr.bf16.mxu0 0
  %709 = vmatpush2.bf16.msra.mxu0 0
  %710 = vmatprep.subr.bf16.mxu0 0
  %711 = vmatpush2.bf16.msra.mxu0 0
  %712 = vmatprep.subr.bf16.mxu0 0
  %713 = vmatpush2.bf16.msra.mxu0 0
  %714 = vmatprep.subr.bf16.mxu0 0
  %715 = vmatpush2.bf16.msra.mxu0 0
  %716 = vmatprep.subr.bf16.mxu0 0
  %717 = vmatpush2.bf16.msra.mxu0 0
  %718 = vmatprep.subr.bf16.mxu0 0
  %719 = vmatpush2.bf16.msra.mxu0 0
  %720 = vmatprep.subr.bf16.mxu0 0
  %721 = vmatpush2.bf16.msra.mxu0 0
  %722 = vmatprep.subr.bf16.mxu0 0
  %723 = vmatpush2.bf16.msra.mxu0 0
  %724 = vmatprep.mubr.bf16.mxu0 0
  %725 = vmatmul.mubr.bf16.gmra.mxu0 %v518
  %v726 = vpop.f32.mrf.mxu0
  %v727 = vadd.f32 %v639, %v726
  %v728 = vpop.f32.mrf.mxu0
  %v729 = vpop.f32.mrf.mxu0
  %v730 = vpop.f32.mrf.mxu0
  %731 = vdwg.mxu0
  %s732 = scalar_lea.vmem %s3, 2
  %v733 = vld [vmem:[%s732] sm:$0x1]
  %v735 = vlaneseq
  %v736 = vshrl.u32 %v735, 7
  %v737 = vsub.s32 0, %v736
  %v738 = vrot.slane %v733, %v737
  %v740 = vadd.f32 %v727, %v738
  %741 = vst [vmem:[#allocation2] sm:$0xff] %v740
  %v742 = vld [vmem:[#allocation2] sm:$0xff]
  %v743 = vpack.c.bf16 %v742, %v742
  %v744 = vld [vmem:[%s4] sm:$0xf]
  %v745 = vld [vmem:[%s4 + $0x4] sm:$0xf]
  %v746 = vld [vmem:[%s4 + $0x8] sm:$0xf]
  %v747 = vld [vmem:[%s4 + $0xc] sm:$0xf]
  %v748 = vld [vmem:[%s4 + $0x10] sm:$0xf]
  %v749 = vld [vmem:[%s4 + $0x14] sm:$0xf]
  %v750 = vld [vmem:[%s4 + $0x18] sm:$0xf]
  %v751 = vld [vmem:[%s4 + $0x1c] sm:$0xf]
  %v752 = vld [vmem:[%s4 + $0x20] sm:$0xf]
  %v753 = vld [vmem:[%s4 + $0x24] sm:$0xf]
  %v754 = vld [vmem:[%s4 + $0x28] sm:$0xf]
  %v755 = vld [vmem:[%s4 + $0x2c] sm:$0xf]
  %v756 = vld [vmem:[%s4 + $0x30] sm:$0xf]
  %v757 = vld [vmem:[%s4 + $0x34] sm:$0xf]
  %v758 = vld [vmem:[%s4 + $0x38] sm:$0xf]
  %v759 = vld [vmem:[%s4 + $0x3c] sm:$0xf]
  %v760 = vld [vmem:[%s5] sm:$0x1]
  %v762 = vlaneseq
  %v763 = vshrl.u32 %v762, 7
  %v764 = vsub.s32 0, %v763
  %v765 = vrot.slane %v760, %v764
  %v783 = vunpack.c.l.b16 %v744
  %v784 = vunpack.c.l.b16 %v745
  %v785 = vunpack.c.l.b16 %v746
  %v786 = vunpack.c.l.b16 %v747
  %v787 = vunpack.c.l.b16 %v748
  %v788 = vunpack.c.l.b16 %v749
  %v789 = vunpack.c.l.b16 %v750
  %v790 = vunpack.c.l.b16 %v751
  %v791 = vunpack.c.l.b16 %v752
  %v792 = vunpack.c.l.b16 %v753
  %v793 = vunpack.c.l.b16 %v754
  %v794 = vunpack.c.l.b16 %v755
  %v795 = vunpack.c.l.b16 %v756
  %v796 = vunpack.c.l.b16 %v757
  %v797 = vunpack.c.l.b16 %v758
  %v798 = vunpack.c.l.b16 %v759
  %v799 = vpack.c.b16 %v784, %v783
  %v800 = vpack.c.b16 %v786, %v785
  %v801 = vpack.c.b16 %v788, %v787
  %v802 = vpack.c.b16 %v790, %v789
  %v803 = vpack.c.b16 %v792, %v791
  %v804 = vpack.c.b16 %v794, %v793
  %v805 = vpack.c.b16 %v796, %v795
  %v806 = vpack.c.b16 %v798, %v797
  %815 = vmatprep.subr.bf16.mxu0 0
  %816 = vmatpush1.bf16.msra.mxu0 %v806
  %817 = vmatprep.subr.bf16.mxu0 0
  %818 = vmatpush1.bf16.msra.mxu0 %v805
  %819 = vmatprep.subr.bf16.mxu0 0
  %820 = vmatpush1.bf16.msra.mxu0 %v804
  %821 = vmatprep.subr.bf16.mxu0 0
  %822 = vmatpush1.bf16.msra.mxu0 %v803
  %823 = vmatprep.subr.bf16.mxu0 0
  %824 = vmatpush1.bf16.msra.mxu0 %v802
  %825 = vmatprep.subr.bf16.mxu0 0
  %826 = vmatpush1.bf16.msra.mxu0 %v801
  %827 = vmatprep.subr.bf16.mxu0 0
  %828 = vmatpush1.bf16.msra.mxu0 %v800
  %829 = vmatprep.subr.bf16.mxu0 0
  %830 = vmatpush1.bf16.msra.mxu0 %v799
  %831 = vmatprep.subr.bf16.mxu0 0
  %832 = vmatpush2.bf16.msra.mxu0 0
  %833 = vmatprep.subr.bf16.mxu0 0
  %834 = vmatpush2.bf16.msra.mxu0 0
  %835 = vmatprep.subr.bf16.mxu0 0
  %836 = vmatpush2.bf16.msra.mxu0 0
  %837 = vmatprep.subr.bf16.mxu0 0
  %838 = vmatpush2.bf16.msra.mxu0 0
  %839 = vmatprep.subr.bf16.mxu0 0
  %840 = vmatpush2.bf16.msra.mxu0 0
  %841 = vmatprep.subr.bf16.mxu0 0
  %842 = vmatpush2.bf16.msra.mxu0 0
  %843 = vmatprep.subr.bf16.mxu0 0
  %844 = vmatpush2.bf16.msra.mxu0 0
  %845 = vmatprep.subr.bf16.mxu0 0
  %846 = vmatpush2.bf16.msra.mxu0 0
  %847 = vmatprep.mubr.bf16.mxu0 0
  %848 = vmatmul.mubr.bf16.gmra.mxu0 %v743
  %v849 = vpop.f32.mrf.mxu0
  %v850 = vadd.f32 %v765, %v849
  %v851 = vpop.f32.mrf.mxu0
  %v852 = vpop.f32.mrf.mxu0
  %v853 = vpop.f32.mrf.mxu0
  %854 = vdwg.mxu0
  %855 = vst [vmem:[%s6] sm:$0xff] %v850
  // Predicated region
  $region26: #{fwd.3} parent=0 // pred_check
    _
  $region27: #{fwd.3} parent=0 // pred_check_branch
    %857 = sbr.rel (0) target = $region29
  $region28: #{fwd.3} parent=0 // pred_region
    _
  $region29: #{fwd.3} parent=0 // pred_fallthru
    _
  // Predicated region
  $region30: #{fwd.3} parent=0 // pred_check
    _
  $region31: #{fwd.3} parent=0 // pred_check_branch
    %859 = sbr.rel (0) target = $region33
  $region32: #{fwd.3} parent=0 // pred_region
    _
  $region33: #{fwd.3} parent=0 // pred_fallthru
    _

// kernel: fwd.5
$region0: #{fwd.5}
  #allocation0 [shape = 'u32[]', space=smem, size = 0x4, offset = 0x4, fixed_abs, tag = 'smem constant byte address 0x4 - core index']
  #allocation1 [shape = 'u32[144,128]{1,0:T(1,128)}', space=vmem, size = 0x12000, scoped, tag = 'internal scratch']
  #allocation2 [shape = 'f32[16,128]{1,0:T(8,128)}', space=vmem, size = 0x2000, scoped, tag = 'scratch operand']
  #allocation3 [shape = 'f32[16,128]{1,0:T(8,128)}', space=vmem, size = 0x2000, scoped, tag = 'scratch operand']
  %s0 = inlined_call_operand.vmem [shape: f32[1,32,128], index: 0, kind: input, shape index: {}]
  %s1 = inlined_call_operand.vmem [shape: bf16[3,128,128], index: 1, kind: input, shape index: {}]
  %s2 = inlined_call_operand.vmem [shape: bf16[3,128,128], index: 2, kind: input, shape index: {}]
  %s3 = inlined_call_operand.vmem [shape: f32[3,1,128], index: 3, kind: input, shape index: {}]
  %s4 = inlined_call_operand.vmem [shape: bf16[128,128], index: 4, kind: input, shape index: {}]
  %s5 = inlined_call_operand.vmem [shape: f32[1,128], index: 5, kind: input, shape index: {}]
  %s6 = inlined_call_operand.vmem [shape: f32[1,4,128], index: 6, kind: output, shape index: {}]
  %s7 = sld [smem:[#allocation0]]
  $region34: #{fwd.5} parent=0
    _
  %s9 = ssub.s32 1, %s7
  %s10 = scalar_select 0, %s9, %s7
  // Predicated region
  $region2: #{fwd.5} parent=0 // pred_check
    _
  $region3: #{fwd.5} parent=0 // pred_check_branch
    %12 = sbr.rel (0) target = $region5
  $region4: #{fwd.5} parent=0 // pred_region
    _
  $region5: #{fwd.5} parent=0 // pred_fallthru
    _
  // Predicated region
  $region6: #{fwd.5} parent=0 // pred_check
    _
  $region7: #{fwd.5} parent=0 // pred_check_branch
    %14 = sbr.rel (0) target = $region9
  $region8: #{fwd.5} parent=0 // pred_region
    _
  $region9: #{fwd.5} parent=0 // pred_fallthru
    _
  // Predicated region
  $region10: #{fwd.5} parent=0 // pred_check
    _
  $region11: #{fwd.5} parent=0 // pred_check_branch
    %16 = sbr.rel (0) target = $region13
  $region12: #{fwd.5} parent=0 // pred_region
    _
  $region13: #{fwd.5} parent=0 // pred_fallthru
    _
  // Predicated region
  $region14: #{fwd.5} parent=0 // pred_check
    _
  $region15: #{fwd.5} parent=0 // pred_check_branch
    %18 = sbr.rel (0) target = $region17
  $region16: #{fwd.5} parent=0 // pred_region
    _
  $region17: #{fwd.5} parent=0 // pred_fallthru
    _
  // Predicated region
  $region18: #{fwd.5} parent=0 // pred_check
    _
  $region19: #{fwd.5} parent=0 // pred_check_branch
    %20 = sbr.rel (0) target = $region21
  $region20: #{fwd.5} parent=0 // pred_region
    _
  $region21: #{fwd.5} parent=0 // pred_fallthru
    _
  // Predicated region
  $region22: #{fwd.5} parent=0 // pred_check
    _
  $region23: #{fwd.5} parent=0 // pred_check_branch
    %22 = sbr.rel (0) target = $region25
  $region24: #{fwd.5} parent=0 // pred_region
    _
  $region25: #{fwd.5} parent=0 // pred_fallthru
    _
  %v24 = vld [vmem:[%s0] ss:$2 sm:$0xff]
  %s25 = scalar_lea.vmem %s0, 16
  %v26 = vld [vmem:[%s25] ss:$2 sm:$0xff]
  %v27 = vpack.c.bf16 %v26, %v24
  %s28 = scalar_lea.vmem %s0, 1
  %v29 = vld [vmem:[%s28] ss:$2 sm:$0xff]
  %s30 = scalar_lea.vmem %s0, 17
  %v31 = vld [vmem:[%s30] ss:$2 sm:$0xff]
  %v32 = vpack.c.bf16 %v31, %v29
  %v33 = vld [vmem:[%s1] sm:$0xf]
  %v34 = vld [vmem:[%s1 + $0x4] sm:$0xf]
  %v35 = vld [vmem:[%s1 + $0x8] sm:$0xf]
  %v36 = vld [vmem:[%s1 + $0xc] sm:$0xf]
  %v37 = vld [vmem:[%s1 + $0x10] sm:$0xf]
  %v38 = vld [vmem:[%s1 + $0x14] sm:$0xf]
  %v39 = vld [vmem:[%s1 + $0x18] sm:$0xf]
  %v40 = vld [vmem:[%s1 + $0x1c] sm:$0xf]
  %v41 = vld [vmem:[%s1 + $0x20] sm:$0xf]
  %v42 = vld [vmem:[%s1 + $0x24] sm:$0xf]
  %v43 = vld [vmem:[%s1 + $0x28] sm:$0xf]
  %v44 = vld [vmem:[%s1 + $0x2c] sm:$0xf]
  %v45 = vld [vmem:[%s1 + $0x30] sm:$0xf]
  %v46 = vld [vmem:[%s1 + $0x34] sm:$0xf]
  %v47 = vld [vmem:[%s1 + $0x38] sm:$0xf]
  %v48 = vld [vmem:[%s1 + $0x3c] sm:$0xf]
  %v49 = vld [vmem:[%s2] sm:$0xf]
  %v50 = vld [vmem:[%s2 + $0x4] sm:$0xf]
  %v51 = vld [vmem:[%s2 + $0x8] sm:$0xf]
  %v52 = vld [vmem:[%s2 + $0xc] sm:$0xf]
  %v53 = vld [vmem:[%s2 + $0x10] sm:$0xf]
  %v54 = vld [vmem:[%s2 + $0x14] sm:$0xf]
  %v55 = vld [vmem:[%s2 + $0x18] sm:$0xf]
  %v56 = vld [vmem:[%s2 + $0x1c] sm:$0xf]
  %v57 = vld [vmem:[%s2 + $0x20] sm:$0xf]
  %v58 = vld [vmem:[%s2 + $0x24] sm:$0xf]
  %v59 = vld [vmem:[%s2 + $0x28] sm:$0xf]
  %v60 = vld [vmem:[%s2 + $0x2c] sm:$0xf]
  %v61 = vld [vmem:[%s2 + $0x30] sm:$0xf]
  %v62 = vld [vmem:[%s2 + $0x34] sm:$0xf]
  %v63 = vld [vmem:[%s2 + $0x38] sm:$0xf]
  %v64 = vld [vmem:[%s2 + $0x3c] sm:$0xf]
  %v81 = vunpack.c.l.b16 %v49
  %v82 = vunpack.c.l.b16 %v50
  %v83 = vunpack.c.l.b16 %v51
  %v84 = vunpack.c.l.b16 %v52
  %v85 = vunpack.c.l.b16 %v53
  %v86 = vunpack.c.l.b16 %v54
  %v87 = vunpack.c.l.b16 %v55
  %v88 = vunpack.c.l.b16 %v56
  %v89 = vunpack.c.l.b16 %v57
  %v90 = vunpack.c.l.b16 %v58
  %v91 = vunpack.c.l.b16 %v59
  %v92 = vunpack.c.l.b16 %v60
  %v93 = vunpack.c.l.b16 %v61
  %v94 = vunpack.c.l.b16 %v62
  %v95 = vunpack.c.l.b16 %v63
  %v96 = vunpack.c.l.b16 %v64
  %v97 = vpack.c.b16 %v82, %v81
  %v98 = vpack.c.b16 %v84, %v83
  %v99 = vpack.c.b16 %v86, %v85
  %v100 = vpack.c.b16 %v88, %v87
  %v101 = vpack.c.b16 %v90, %v89
  %v102 = vpack.c.b16 %v92, %v91
  %v103 = vpack.c.b16 %v94, %v93
  %v104 = vpack.c.b16 %v96, %v95
  %113 = vmatprep.subr.bf16.mxu0 0
  %114 = vmatpush1.bf16.msra.mxu0 %v104
  %115 = vmatprep.subr.bf16.mxu0 0
  %116 = vmatpush1.bf16.msra.mxu0 %v103
  %117 = vmatprep.subr.bf16.mxu0 0
  %118 = vmatpush1.bf16.msra.mxu0 %v102
  %119 = vmatprep.subr.bf16.mxu0 0
  %120 = vmatpush1.bf16.msra.mxu0 %v101
  %121 = vmatprep.subr.bf16.mxu0 0
  %122 = vmatpush1.bf16.msra.mxu0 %v100
  %123 = vmatprep.subr.bf16.mxu0 0
  %124 = vmatpush1.bf16.msra.mxu0 %v99
  %125 = vmatprep.subr.bf16.mxu0 0
  %126 = vmatpush1.bf16.msra.mxu0 %v98
  %127 = vmatprep.subr.bf16.mxu0 0
  %128 = vmatpush1.bf16.msra.mxu0 %v97
  %129 = vmatprep.subr.bf16.mxu0 0
  %130 = vmatpush2.bf16.msra.mxu0 0
  %131 = vmatprep.subr.bf16.mxu0 0
  %132 = vmatpush2.bf16.msra.mxu0 0
  %133 = vmatprep.subr.bf16.mxu0 0
  %134 = vmatpush2.bf16.msra.mxu0 0
  %135 = vmatprep.subr.bf16.mxu0 0
  %136 = vmatpush2.bf16.msra.mxu0 0
  %137 = vmatprep.subr.bf16.mxu0 0
  %138 = vmatpush2.bf16.msra.mxu0 0
  %139 = vmatprep.subr.bf16.mxu0 0
  %140 = vmatpush2.bf16.msra.mxu0 0
  %141 = vmatprep.subr.bf16.mxu0 0
  %142 = vmatpush2.bf16.msra.mxu0 0
  %143 = vmatprep.subr.bf16.mxu0 0
  %144 = vmatpush2.bf16.msra.mxu0 0
  %145 = vmatprep.mubr.bf16.mxu0 0
  %146 = vmatmul.mubr.bf16.gmra.mxu0 %v32
  %v147 = vpop.f32.mrf.mxu0
  %v148 = vadd.f32 0.0, %v147
  %v149 = vpop.f32.mrf.mxu0
  %v150 = vpop.f32.mrf.mxu0
  %v151 = vadd.f32 0.0, %v150
  %v152 = vpop.f32.mrf.mxu0
  %153 = vdwg.mxu0
  %v170 = vunpack.c.l.b16 %v33
  %v171 = vunpack.c.l.b16 %v34
  %v172 = vunpack.c.l.b16 %v35
  %v173 = vunpack.c.l.b16 %v36
  %v174 = vunpack.c.l.b16 %v37
  %v175 = vunpack.c.l.b16 %v38
  %v176 = vunpack.c.l.b16 %v39
  %v177 = vunpack.c.l.b16 %v40
  %v178 = vunpack.c.l.b16 %v41
  %v179 = vunpack.c.l.b16 %v42
  %v180 = vunpack.c.l.b16 %v43
  %v181 = vunpack.c.l.b16 %v44
  %v182 = vunpack.c.l.b16 %v45
  %v183 = vunpack.c.l.b16 %v46
  %v184 = vunpack.c.l.b16 %v47
  %v185 = vunpack.c.l.b16 %v48
  %v186 = vpack.c.b16 %v171, %v170
  %v187 = vpack.c.b16 %v173, %v172
  %v188 = vpack.c.b16 %v175, %v174
  %v189 = vpack.c.b16 %v177, %v176
  %v190 = vpack.c.b16 %v179, %v178
  %v191 = vpack.c.b16 %v181, %v180
  %v192 = vpack.c.b16 %v183, %v182
  %v193 = vpack.c.b16 %v185, %v184
  %202 = vmatprep.subr.bf16.mxu0 0
  %203 = vmatpush1.bf16.msra.mxu0 %v193
  %204 = vmatprep.subr.bf16.mxu0 0
  %205 = vmatpush1.bf16.msra.mxu0 %v192
  %206 = vmatprep.subr.bf16.mxu0 0
  %207 = vmatpush1.bf16.msra.mxu0 %v191
  %208 = vmatprep.subr.bf16.mxu0 0
  %209 = vmatpush1.bf16.msra.mxu0 %v190
  %210 = vmatprep.subr.bf16.mxu0 0
  %211 = vmatpush1.bf16.msra.mxu0 %v189
  %212 = vmatprep.subr.bf16.mxu0 0
  %213 = vmatpush1.bf16.msra.mxu0 %v188
  %214 = vmatprep.subr.bf16.mxu0 0
  %215 = vmatpush1.bf16.msra.mxu0 %v187
  %216 = vmatprep.subr.bf16.mxu0 0
  %217 = vmatpush1.bf16.msra.mxu0 %v186
  %218 = vmatprep.subr.bf16.mxu0 0
  %219 = vmatpush2.bf16.msra.mxu0 0
  %220 = vmatprep.subr.bf16.mxu0 0
  %221 = vmatpush2.bf16.msra.mxu0 0
  %222 = vmatprep.subr.bf16.mxu0 0
  %223 = vmatpush2.bf16.msra.mxu0 0
  %224 = vmatprep.subr.bf16.mxu0 0
  %225 = vmatpush2.bf16.msra.mxu0 0
  %226 = vmatprep.subr.bf16.mxu0 0
  %227 = vmatpush2.bf16.msra.mxu0 0
  %228 = vmatprep.subr.bf16.mxu0 0
  %229 = vmatpush2.bf16.msra.mxu0 0
  %230 = vmatprep.subr.bf16.mxu0 0
  %231 = vmatpush2.bf16.msra.mxu0 0
  %232 = vmatprep.subr.bf16.mxu0 0
  %233 = vmatpush2.bf16.msra.mxu0 0
  %234 = vmatprep.mubr.bf16.mxu0 0
  %235 = vmatmul.mubr.bf16.gmra.mxu0 %v27
  %v236 = vpop.f32.mrf.mxu0
  %v237 = vadd.f32 %v148, %v236
  %v238 = vpop.f32.mrf.mxu0
  %v239 = vpop.f32.mrf.mxu0
  %v240 = vadd.f32 %v151, %v239
  %v241 = vpop.f32.mrf.mxu0
  %242 = vdwg.mxu0
  %v243 = vld [vmem:[%s3] sm:$0x1]
  %v245 = vlaneseq
  %v246 = vshrl.u32 %v245, 7
  %v247 = vsub.s32 0, %v246
  %v248 = vrot.slane %v243, %v247
  %v250 = vadd.f32 %v237, %v248
  %v251 = vadd.f32 %v240, %v248
  %252 = vst [vmem:[#allocation2] sm:$0xff] %v250
  %253 = vst [vmem:[#allocation2 + $0x8] sm:$0xff] %v251
  %v254 = vld [vmem:[#allocation2] ss:$2 sm:$0xff]
  %v255 = vpack.c.bf16 %v254, %v254
  %s256 = scalar_lea.vmem [#allocation2], 1
  %v257 = vld [vmem:[%s256] ss:$2 sm:$0xff]
  %v258 = vpack.c.bf16 %v257, %v257
  %s259 = scalar_lea.vmem %s1, 64
  %v260 = vld [vmem:[%s259] sm:$0xf]
  %v261 = vld [vmem:[%s259 + $0x4] sm:$0xf]
  %v262 = vld [vmem:[%s259 + $0x8] sm:$0xf]
  %v263 = vld [vmem:[%s259 + $0xc] sm:$0xf]
  %v264 = vld [vmem:[%s259 + $0x10] sm:$0xf]
  %v265 = vld [vmem:[%s259 + $0x14] sm:$0xf]
  %v266 = vld [vmem:[%s259 + $0x18] sm:$0xf]
  %v267 = vld [vmem:[%s259 + $0x1c] sm:$0xf]
  %v268 = vld [vmem:[%s259 + $0x20] sm:$0xf]
  %v269 = vld [vmem:[%s259 + $0x24] sm:$0xf]
  %v270 = vld [vmem:[%s259 + $0x28] sm:$0xf]
  %v271 = vld [vmem:[%s259 + $0x2c] sm:$0xf]
  %v272 = vld [vmem:[%s259 + $0x30] sm:$0xf]
  %v273 = vld [vmem:[%s259 + $0x34] sm:$0xf]
  %v274 = vld [vmem:[%s259 + $0x38] sm:$0xf]
  %v275 = vld [vmem:[%s259 + $0x3c] sm:$0xf]
  %s276 = scalar_lea.vmem %s2, 64
  %v277 = vld [vmem:[%s276] sm:$0xf]
  %v278 = vld [vmem:[%s276 + $0x4] sm:$0xf]
  %v279 = vld [vmem:[%s276 + $0x8] sm:$0xf]
  %v280 = vld [vmem:[%s276 + $0xc] sm:$0xf]
  %v281 = vld [vmem:[%s276 + $0x10] sm:$0xf]
  %v282 = vld [vmem:[%s276 + $0x14] sm:$0xf]
  %v283 = vld [vmem:[%s276 + $0x18] sm:$0xf]
  %v284 = vld [vmem:[%s276 + $0x1c] sm:$0xf]
  %v285 = vld [vmem:[%s276 + $0x20] sm:$0xf]
  %v286 = vld [vmem:[%s276 + $0x24] sm:$0xf]
  %v287 = vld [vmem:[%s276 + $0x28] sm:$0xf]
  %v288 = vld [vmem:[%s276 + $0x2c] sm:$0xf]
  %v289 = vld [vmem:[%s276 + $0x30] sm:$0xf]
  %v290 = vld [vmem:[%s276 + $0x34] sm:$0xf]
  %v291 = vld [vmem:[%s276 + $0x38] sm:$0xf]
  %v292 = vld [vmem:[%s276 + $0x3c] sm:$0xf]
  %v309 = vunpack.c.l.b16 %v277
  %v310 = vunpack.c.l.b16 %v278
  %v311 = vunpack.c.l.b16 %v279
  %v312 = vunpack.c.l.b16 %v280
  %v313 = vunpack.c.l.b16 %v281
  %v314 = vunpack.c.l.b16 %v282
  %v315 = vunpack.c.l.b16 %v283
  %v316 = vunpack.c.l.b16 %v284
  %v317 = vunpack.c.l.b16 %v285
  %v318 = vunpack.c.l.b16 %v286
  %v319 = vunpack.c.l.b16 %v287
  %v320 = vunpack.c.l.b16 %v288
  %v321 = vunpack.c.l.b16 %v289
  %v322 = vunpack.c.l.b16 %v290
  %v323 = vunpack.c.l.b16 %v291
  %v324 = vunpack.c.l.b16 %v292
  %v325 = vpack.c.b16 %v310, %v309
  %v326 = vpack.c.b16 %v312, %v311
  %v327 = vpack.c.b16 %v314, %v313
  %v328 = vpack.c.b16 %v316, %v315
  %v329 = vpack.c.b16 %v318, %v317
  %v330 = vpack.c.b16 %v320, %v319
  %v331 = vpack.c.b16 %v322, %v321
  %v332 = vpack.c.b16 %v324, %v323
  %341 = vmatprep.subr.bf16.mxu0 0
  %342 = vmatpush1.bf16.msra.mxu0 %v332
  %343 = vmatprep.subr.bf16.mxu0 0
  %344 = vmatpush1.bf16.msra.mxu0 %v331
  %345 = vmatprep.subr.bf16.mxu0 0
  %346 = vmatpush1.bf16.msra.mxu0 %v330
  %347 = vmatprep.subr.bf16.mxu0 0
  %348 = vmatpush1.bf16.msra.mxu0 %v329
  %349 = vmatprep.subr.bf16.mxu0 0
  %350 = vmatpush1.bf16.msra.mxu0 %v328
  %351 = vmatprep.subr.bf16.mxu0 0
  %352 = vmatpush1.bf16.msra.mxu0 %v327
  %353 = vmatprep.subr.bf16.mxu0 0
  %354 = vmatpush1.bf16.msra.mxu0 %v326
  %355 = vmatprep.subr.bf16.mxu0 0
  %356 = vmatpush1.bf16.msra.mxu0 %v325
  %357 = vmatprep.subr.bf16.mxu0 0
  %358 = vmatpush2.bf16.msra.mxu0 0
  %359 = vmatprep.subr.bf16.mxu0 0
  %360 = vmatpush2.bf16.msra.mxu0 0
  %361 = vmatprep.subr.bf16.mxu0 0
  %362 = vmatpush2.bf16.msra.mxu0 0
  %363 = vmatprep.subr.bf16.mxu0 0
  %364 = vmatpush2.bf16.msra.mxu0 0
  %365 = vmatprep.subr.bf16.mxu0 0
  %366 = vmatpush2.bf16.msra.mxu0 0
  %367 = vmatprep.subr.bf16.mxu0 0
  %368 = vmatpush2.bf16.msra.mxu0 0
  %369 = vmatprep.subr.bf16.mxu0 0
  %370 = vmatpush2.bf16.msra.mxu0 0
  %371 = vmatprep.subr.bf16.mxu0 0
  %372 = vmatpush2.bf16.msra.mxu0 0
  %373 = vmatprep.mubr.bf16.mxu0 0
  %374 = vmatmul.mubr.bf16.gmra.mxu0 %v258
  %v375 = vpop.f32.mrf.mxu0
  %v376 = vadd.f32 0.0, %v375
  %v377 = vpop.f32.mrf.mxu0
  %v378 = vpop.f32.mrf.mxu0
  %v379 = vpop.f32.mrf.mxu0
  %380 = vdwg.mxu0
  %v397 = vunpack.c.l.b16 %v260
  %v398 = vunpack.c.l.b16 %v261
  %v399 = vunpack.c.l.b16 %v262
  %v400 = vunpack.c.l.b16 %v263
  %v401 = vunpack.c.l.b16 %v264
  %v402 = vunpack.c.l.b16 %v265
  %v403 = vunpack.c.l.b16 %v266
  %v404 = vunpack.c.l.b16 %v267
  %v405 = vunpack.c.l.b16 %v268
  %v406 = vunpack.c.l.b16 %v269
  %v407 = vunpack.c.l.b16 %v270
  %v408 = vunpack.c.l.b16 %v271
  %v409 = vunpack.c.l.b16 %v272
  %v410 = vunpack.c.l.b16 %v273
  %v411 = vunpack.c.l.b16 %v274
  %v412 = vunpack.c.l.b16 %v275
  %v413 = vpack.c.b16 %v398, %v397
  %v414 = vpack.c.b16 %v400, %v399
  %v415 = vpack.c.b16 %v402, %v401
  %v416 = vpack.c.b16 %v404, %v403
  %v417 = vpack.c.b16 %v406, %v405
  %v418 = vpack.c.b16 %v408, %v407
  %v419 = vpack.c.b16 %v410, %v409
  %v420 = vpack.c.b16 %v412, %v411
  %429 = vmatprep.subr.bf16.mxu0 0
  %430 = vmatpush1.bf16.msra.mxu0 %v420
  %431 = vmatprep.subr.bf16.mxu0 0
  %432 = vmatpush1.bf16.msra.mxu0 %v419
  %433 = vmatprep.subr.bf16.mxu0 0
  %434 = vmatpush1.bf16.msra.mxu0 %v418
  %435 = vmatprep.subr.bf16.mxu0 0
  %436 = vmatpush1.bf16.msra.mxu0 %v417
  %437 = vmatprep.subr.bf16.mxu0 0
  %438 = vmatpush1.bf16.msra.mxu0 %v416
  %439 = vmatprep.subr.bf16.mxu0 0
  %440 = vmatpush1.bf16.msra.mxu0 %v415
  %441 = vmatprep.subr.bf16.mxu0 0
  %442 = vmatpush1.bf16.msra.mxu0 %v414
  %443 = vmatprep.subr.bf16.mxu0 0
  %444 = vmatpush1.bf16.msra.mxu0 %v413
  %445 = vmatprep.subr.bf16.mxu0 0
  %446 = vmatpush2.bf16.msra.mxu0 0
  %447 = vmatprep.subr.bf16.mxu0 0
  %448 = vmatpush2.bf16.msra.mxu0 0
  %449 = vmatprep.subr.bf16.mxu0 0
  %450 = vmatpush2.bf16.msra.mxu0 0
  %451 = vmatprep.subr.bf16.mxu0 0
  %452 = vmatpush2.bf16.msra.mxu0 0
  %453 = vmatprep.subr.bf16.mxu0 0
  %454 = vmatpush2.bf16.msra.mxu0 0
  %455 = vmatprep.subr.bf16.mxu0 0
  %456 = vmatpush2.bf16.msra.mxu0 0
  %457 = vmatprep.subr.bf16.mxu0 0
  %458 = vmatpush2.bf16.msra.mxu0 0
  %459 = vmatprep.subr.bf16.mxu0 0
  %460 = vmatpush2.bf16.msra.mxu0 0
  %461 = vmatprep.mubr.bf16.mxu0 0
  %462 = vmatmul.mubr.bf16.gmra.mxu0 %v255
  %v463 = vpop.f32.mrf.mxu0
  %v464 = vadd.f32 %v376, %v463
  %v465 = vpop.f32.mrf.mxu0
  %v466 = vpop.f32.mrf.mxu0
  %v467 = vpop.f32.mrf.mxu0
  %468 = vdwg.mxu0
  %s469 = scalar_lea.vmem %s3, 1
  %v470 = vld [vmem:[%s469] sm:$0x1]
  %v472 = vlaneseq
  %v473 = vshrl.u32 %v472, 7
  %v474 = vsub.s32 0, %v473
  %v475 = vrot.slane %v470, %v474
  %v477 = vadd.f32 %v464, %v475
  %478 = vst [vmem:[#allocation3] sm:$0xff] %v477
  %v479 = vld [vmem:[#allocation3] ss:$2 sm:$0xf]
  %v480 = vpack.c.bf16 %v479, %v479
  %s481 = scalar_lea.vmem [#allocation3], 1
  %v482 = vld [vmem:[%s481] ss:$2 sm:$0xf]
  %v483 = vpack.c.bf16 %v482, %v482
  %s484 = scalar_lea.vmem %s1, 128
  %v485 = vld [vmem:[%s484] sm:$0xf]
  %v486 = vld [vmem:[%s484 + $0x4] sm:$0xf]
  %v487 = vld [vmem:[%s484 + $0x8] sm:$0xf]
  %v488 = vld [vmem:[%s484 + $0xc] sm:$0xf]
  %v489 = vld [vmem:[%s484 + $0x10] sm:$0xf]
  %v490 = vld [vmem:[%s484 + $0x14] sm:$0xf]
  %v491 = vld [vmem:[%s484 + $0x18] sm:$0xf]
  %v492 = vld [vmem:[%s484 + $0x1c] sm:$0xf]
  %v493 = vld [vmem:[%s484 + $0x20] sm:$0xf]
  %v494 = vld [vmem:[%s484 + $0x24] sm:$0xf]
  %v495 = vld [vmem:[%s484 + $0x28] sm:$0xf]
  %v496 = vld [vmem:[%s484 + $0x2c] sm:$0xf]
  %v497 = vld [vmem:[%s484 + $0x30] sm:$0xf]
  %v498 = vld [vmem:[%s484 + $0x34] sm:$0xf]
  %v499 = vld [vmem:[%s484 + $0x38] sm:$0xf]
  %v500 = vld [vmem:[%s484 + $0x3c] sm:$0xf]
  %s501 = scalar_lea.vmem %s2, 128
  %v502 = vld [vmem:[%s501] sm:$0xf]
  %v503 = vld [vmem:[%s501 + $0x4] sm:$0xf]
  %v504 = vld [vmem:[%s501 + $0x8] sm:$0xf]
  %v505 = vld [vmem:[%s501 + $0xc] sm:$0xf]
  %v506 = vld [vmem:[%s501 + $0x10] sm:$0xf]
  %v507 = vld [vmem:[%s501 + $0x14] sm:$0xf]
  %v508 = vld [vmem:[%s501 + $0x18] sm:$0xf]
  %v509 = vld [vmem:[%s501 + $0x1c] sm:$0xf]
  %v510 = vld [vmem:[%s501 + $0x20] sm:$0xf]
  %v511 = vld [vmem:[%s501 + $0x24] sm:$0xf]
  %v512 = vld [vmem:[%s501 + $0x28] sm:$0xf]
  %v513 = vld [vmem:[%s501 + $0x2c] sm:$0xf]
  %v514 = vld [vmem:[%s501 + $0x30] sm:$0xf]
  %v515 = vld [vmem:[%s501 + $0x34] sm:$0xf]
  %v516 = vld [vmem:[%s501 + $0x38] sm:$0xf]
  %v517 = vld [vmem:[%s501 + $0x3c] sm:$0xf]
  %v534 = vunpack.c.l.b16 %v502
  %v535 = vunpack.c.l.b16 %v503
  %v536 = vunpack.c.l.b16 %v504
  %v537 = vunpack.c.l.b16 %v505
  %v538 = vunpack.c.l.b16 %v506
  %v539 = vunpack.c.l.b16 %v507
  %v540 = vunpack.c.l.b16 %v508
  %v541 = vunpack.c.l.b16 %v509
  %v542 = vunpack.c.l.b16 %v510
  %v543 = vunpack.c.l.b16 %v511
  %v544 = vunpack.c.l.b16 %v512
  %v545 = vunpack.c.l.b16 %v513
  %v546 = vunpack.c.l.b16 %v514
  %v547 = vunpack.c.l.b16 %v515
  %v548 = vunpack.c.l.b16 %v516
  %v549 = vunpack.c.l.b16 %v517
  %v550 = vpack.c.b16 %v535, %v534
  %v551 = vpack.c.b16 %v537, %v536
  %v552 = vpack.c.b16 %v539, %v538
  %v553 = vpack.c.b16 %v541, %v540
  %v554 = vpack.c.b16 %v543, %v542
  %v555 = vpack.c.b16 %v545, %v544
  %v556 = vpack.c.b16 %v547, %v546
  %v557 = vpack.c.b16 %v549, %v548
  %566 = vmatprep.subr.bf16.mxu0 0
  %567 = vmatpush1.bf16.msra.mxu0 %v557
  %568 = vmatprep.subr.bf16.mxu0 0
  %569 = vmatpush1.bf16.msra.mxu0 %v556
  %570 = vmatprep.subr.bf16.mxu0 0
  %571 = vmatpush1.bf16.msra.mxu0 %v555
  %572 = vmatprep.subr.bf16.mxu0 0
  %573 = vmatpush1.bf16.msra.mxu0 %v554
  %574 = vmatprep.subr.bf16.mxu0 0
  %575 = vmatpush1.bf16.msra.mxu0 %v553
  %576 = vmatprep.subr.bf16.mxu0 0
  %577 = vmatpush1.bf16.msra.mxu0 %v552
  %578 = vmatprep.subr.bf16.mxu0 0
  %579 = vmatpush1.bf16.msra.mxu0 %v551
  %580 = vmatprep.subr.bf16.mxu0 0
  %581 = vmatpush1.bf16.msra.mxu0 %v550
  %582 = vmatprep.subr.bf16.mxu0 0
  %583 = vmatpush2.bf16.msra.mxu0 0
  %584 = vmatprep.subr.bf16.mxu0 0
  %585 = vmatpush2.bf16.msra.mxu0 0
  %586 = vmatprep.subr.bf16.mxu0 0
  %587 = vmatpush2.bf16.msra.mxu0 0
  %588 = vmatprep.subr.bf16.mxu0 0
  %589 = vmatpush2.bf16.msra.mxu0 0
  %590 = vmatprep.subr.bf16.mxu0 0
  %591 = vmatpush2.bf16.msra.mxu0 0
  %592 = vmatprep.subr.bf16.mxu0 0
  %593 = vmatpush2.bf16.msra.mxu0 0
  %594 = vmatprep.subr.bf16.mxu0 0
  %595 = vmatpush2.bf16.msra.mxu0 0
  %596 = vmatprep.subr.bf16.mxu0 0
  %597 = vmatpush2.bf16.msra.mxu0 0
  %598 = vmatprep.mubr.bf16.mxu0 0
  %599 = vmatmul.mubr.bf16.gmra.mxu0 %v483
  %v600 = vpop.f32.mrf.mxu0
  %v601 = vadd.f32 0.0, %v600
  %v602 = vpop.f32.mrf.mxu0
  %v603 = vpop.f32.mrf.mxu0
  %v604 = vpop.f32.mrf.mxu0
  %605 = vdwg.mxu0
  %v622 = vunpack.c.l.b16 %v485
  %v623 = vunpack.c.l.b16 %v486
  %v624 = vunpack.c.l.b16 %v487
  %v625 = vunpack.c.l.b16 %v488
  %v626 = vunpack.c.l.b16 %v489
  %v627 = vunpack.c.l.b16 %v490
  %v628 = vunpack.c.l.b16 %v491
  %v629 = vunpack.c.l.b16 %v492
  %v630 = vunpack.c.l.b16 %v493
  %v631 = vunpack.c.l.b16 %v494
  %v632 = vunpack.c.l.b16 %v495
  %v633 = vunpack.c.l.b16 %v496
  %v634 = vunpack.c.l.b16 %v497
  %v635 = vunpack.c.l.b16 %v498
  %v636 = vunpack.c.l.b16 %v499
  %v637 = vunpack.c.l.b16 %v500
  %v638 = vpack.c.b16 %v623, %v622
  %v639 = vpack.c.b16 %v625, %v624
  %v640 = vpack.c.b16 %v627, %v626
  %v641 = vpack.c.b16 %v629, %v628
  %v642 = vpack.c.b16 %v631, %v630
  %v643 = vpack.c.b16 %v633, %v632
  %v644 = vpack.c.b16 %v635, %v634
  %v645 = vpack.c.b16 %v637, %v636
  %654 = vmatprep.subr.bf16.mxu0 0
  %655 = vmatpush1.bf16.msra.mxu0 %v645
  %656 = vmatprep.subr.bf16.mxu0 0
  %657 = vmatpush1.bf16.msra.mxu0 %v644
  %658 = vmatprep.subr.bf16.mxu0 0
  %659 = vmatpush1.bf16.msra.mxu0 %v643
  %660 = vmatprep.subr.bf16.mxu0 0
  %661 = vmatpush1.bf16.msra.mxu0 %v642
  %662 = vmatprep.subr.bf16.mxu0 0
  %663 = vmatpush1.bf16.msra.mxu0 %v641
  %664 = vmatprep.subr.bf16.mxu0 0
  %665 = vmatpush1.bf16.msra.mxu0 %v640
  %666 = vmatprep.subr.bf16.mxu0 0
  %667 = vmatpush1.bf16.msra.mxu0 %v639
  %668 = vmatprep.subr.bf16.mxu0 0
  %669 = vmatpush1.bf16.msra.mxu0 %v638
  %670 = vmatprep.subr.bf16.mxu0 0
  %671 = vmatpush2.bf16.msra.mxu0 0
  %672 = vmatprep.subr.bf16.mxu0 0
  %673 = vmatpush2.bf16.msra.mxu0 0
  %674 = vmatprep.subr.bf16.mxu0 0
  %675 = vmatpush2.bf16.msra.mxu0 0
  %676 = vmatprep.subr.bf16.mxu0 0
  %677 = vmatpush2.bf16.msra.mxu0 0
  %678 = vmatprep.subr.bf16.mxu0 0
  %679 = vmatpush2.bf16.msra.mxu0 0
  %680 = vmatprep.subr.bf16.mxu0 0
  %681 = vmatpush2.bf16.msra.mxu0 0
  %682 = vmatprep.subr.bf16.mxu0 0
  %683 = vmatpush2.bf16.msra.mxu0 0
  %684 = vmatprep.subr.bf16.mxu0 0
  %685 = vmatpush2.bf16.msra.mxu0 0
  %686 = vmatprep.mubr.bf16.mxu0 0
  %687 = vmatmul.mubr.bf16.gmra.mxu0 %v480
  %v688 = vpop.f32.mrf.mxu0
  %v689 = vadd.f32 %v601, %v688
  %v690 = vpop.f32.mrf.mxu0
  %v691 = vpop.f32.mrf.mxu0
  %v692 = vpop.f32.mrf.mxu0
  %693 = vdwg.mxu0
  %s694 = scalar_lea.vmem %s3, 2
  %v695 = vld [vmem:[%s694] sm:$0x1]
  %v697 = vlaneseq
  %v698 = vshrl.u32 %v697, 7
  %v699 = vsub.s32 0, %v698
  %v700 = vrot.slane %v695, %v699
  %v702 = vadd.f32 %v689, %v700
  %703 = vst [vmem:[#allocation2] sm:$0xf] %v702
  %v704 = vld [vmem:[#allocation2] sm:$0xf]
  %v705 = vpack.c.bf16 %v704, %v704
  %v706 = vld [vmem:[%s4] sm:$0xf]
  %v707 = vld [vmem:[%s4 + $0x4] sm:$0xf]
  %v708 = vld [vmem:[%s4 + $0x8] sm:$0xf]
  %v709 = vld [vmem:[%s4 + $0xc] sm:$0xf]
  %v710 = vld [vmem:[%s4 + $0x10] sm:$0xf]
  %v711 = vld [vmem:[%s4 + $0x14] sm:$0xf]
  %v712 = vld [vmem:[%s4 + $0x18] sm:$0xf]
  %v713 = vld [vmem:[%s4 + $0x1c] sm:$0xf]
  %v714 = vld [vmem:[%s4 + $0x20] sm:$0xf]
  %v715 = vld [vmem:[%s4 + $0x24] sm:$0xf]
  %v716 = vld [vmem:[%s4 + $0x28] sm:$0xf]
  %v717 = vld [vmem:[%s4 + $0x2c] sm:$0xf]
  %v718 = vld [vmem:[%s4 + $0x30] sm:$0xf]
  %v719 = vld [vmem:[%s4 + $0x34] sm:$0xf]
  %v720 = vld [vmem:[%s4 + $0x38] sm:$0xf]
  %v721 = vld [vmem:[%s4 + $0x3c] sm:$0xf]
  %v722 = vld [vmem:[%s5] sm:$0x1]
  %v724 = vlaneseq
  %v725 = vshrl.u32 %v724, 7
  %v726 = vsub.s32 0, %v725
  %v727 = vrot.slane %v722, %v726
  %v745 = vunpack.c.l.b16 %v706
  %v746 = vunpack.c.l.b16 %v707
  %v747 = vunpack.c.l.b16 %v708
  %v748 = vunpack.c.l.b16 %v709
  %v749 = vunpack.c.l.b16 %v710
  %v750 = vunpack.c.l.b16 %v711
  %v751 = vunpack.c.l.b16 %v712
  %v752 = vunpack.c.l.b16 %v713
  %v753 = vunpack.c.l.b16 %v714
  %v754 = vunpack.c.l.b16 %v715
  %v755 = vunpack.c.l.b16 %v716
  %v756 = vunpack.c.l.b16 %v717
  %v757 = vunpack.c.l.b16 %v718
  %v758 = vunpack.c.l.b16 %v719
  %v759 = vunpack.c.l.b16 %v720
  %v760 = vunpack.c.l.b16 %v721
  %v761 = vpack.c.b16 %v746, %v745
  %v762 = vpack.c.b16 %v748, %v747
  %v763 = vpack.c.b16 %v750, %v749
  %v764 = vpack.c.b16 %v752, %v751
  %v765 = vpack.c.b16 %v754, %v753
  %v766 = vpack.c.b16 %v756, %v755
  %v767 = vpack.c.b16 %v758, %v757
  %v768 = vpack.c.b16 %v760, %v759
  %777 = vmatprep.subr.bf16.mxu0 0
  %778 = vmatpush1.bf16.msra.mxu0 %v768
  %779 = vmatprep.subr.bf16.mxu0 0
  %780 = vmatpush1.bf16.msra.mxu0 %v767
  %781 = vmatprep.subr.bf16.mxu0 0
  %782 = vmatpush1.bf16.msra.mxu0 %v766
  %783 = vmatprep.subr.bf16.mxu0 0
  %784 = vmatpush1.bf16.msra.mxu0 %v765
  %785 = vmatprep.subr.bf16.mxu0 0
  %786 = vmatpush1.bf16.msra.mxu0 %v764
  %787 = vmatprep.subr.bf16.mxu0 0
  %788 = vmatpush1.bf16.msra.mxu0 %v763
  %789 = vmatprep.subr.bf16.mxu0 0
  %790 = vmatpush1.bf16.msra.mxu0 %v762
  %791 = vmatprep.subr.bf16.mxu0 0
  %792 = vmatpush1.bf16.msra.mxu0 %v761
  %793 = vmatprep.subr.bf16.mxu0 0
  %794 = vmatpush2.bf16.msra.mxu0 0
  %795 = vmatprep.subr.bf16.mxu0 0
  %796 = vmatpush2.bf16.msra.mxu0 0
  %797 = vmatprep.subr.bf16.mxu0 0
  %798 = vmatpush2.bf16.msra.mxu0 0
  %799 = vmatprep.subr.bf16.mxu0 0
  %800 = vmatpush2.bf16.msra.mxu0 0
  %801 = vmatprep.subr.bf16.mxu0 0
  %802 = vmatpush2.bf16.msra.mxu0 0
  %803 = vmatprep.subr.bf16.mxu0 0
  %804 = vmatpush2.bf16.msra.mxu0 0
  %805 = vmatprep.subr.bf16.mxu0 0
  %806 = vmatpush2.bf16.msra.mxu0 0
  %807 = vmatprep.subr.bf16.mxu0 0
  %808 = vmatpush2.bf16.msra.mxu0 0
  %809 = vmatprep.mubr.bf16.mxu0 0
  %810 = vmatmul.mubr.bf16.gmra.mxu0 %v705
  %v811 = vpop.f32.mrf.mxu0
  %v812 = vadd.f32 %v727, %v811
  %v813 = vpop.f32.mrf.mxu0
  %v814 = vpop.f32.mrf.mxu0
  %v815 = vpop.f32.mrf.mxu0
  %816 = vdwg.mxu0
  %817 = vst [vmem:[%s6] sm:$0xf] %v812
  // Predicated region
  $region26: #{fwd.5} parent=0 // pred_check
    _
  $region27: #{fwd.5} parent=0 // pred_check_branch
    %819 = sbr.rel (0) target = $region29
  $region28: #{fwd.5} parent=0 // pred_region
    _
  $region29: #{fwd.5} parent=0 // pred_fallthru
    _
  // Predicated region
  $region30: #{fwd.5} parent=0 // pred_check
    _
  $region31: #{fwd.5} parent=0 // pred_check_branch
    %821 = sbr.rel (0) target = $region33
  $region32: #{fwd.5} parent=0 // pred_region
    _
  $region33: #{fwd.5} parent=0 // pred_fallthru
    _

</llo_original>
